<compile_context>
chip_gen: v7x
topology: tpu7x:2x2x1
jax: 0.10.0
libtpu: 0.0.40
codegen_flags: <defaults>
</compile_context>

<pallas_src>
import functools
import math

import jax
import jax.numpy as jnp
from jax.experimental import pallas as pl
from jax.experimental.pallas import tpu as pltpu


# ----------------------------- Pallas kernel --------------------------------

def _se_fused_kernel(x_ref, w1_ref, b1_ref, w2_ref, b2_ref, o_ref, *scratch,
                     resident, inv_hw):
    """Fused SE forward.

    grid = (batch_tiles, 2 phases, hw_tiles)
      phase 0: accumulate spatial sums (VPU, lane-preserving), FC epilogue on
               the last HW tile -> replicated per-channel scale in VMEM.
      phase 1: out_tile = x_tile * scale  (pure VPU multiply).
    """
    if resident:
        x_res, acc_ref, scale_ref = scratch     # x_res: (tb, C, HW_pad)
    else:
        acc_ref, scale_ref = scratch

    phase = pl.program_id(1)
    i = pl.program_id(2)
    t_hw = x_ref.shape[-1]
    n_chunks = t_hw // 128

    # ------------------------- phase 0: pool + FC ---------------------------
    @pl.when(phase == 0)
    def _pool_phase():
        @pl.when(i == 0)
        def _():
            acc_ref[...] = jnp.zeros_like(acc_ref)

        x_tile = x_ref[...]                                     # (tb, C, t_hw)
        if resident:
            start = pl.multiple_of(i * t_hw, 128)
            x_res[:, :, pl.ds(start, t_hw)] = x_tile            # keep on-chip

        # lane-preserving accumulation: VPU adds only, no per-tile XLU reduce.
        acc = acc_ref[...]
        for j in range(n_chunks):
            acc = acc + x_tile[:, :, j * 128:(j + 1) * 128]
        acc_ref[...] = acc

        @pl.when(i == pl.num_programs(2) - 1)
        def _epilogue():
            # single cross-lane reduce for the whole batch-tile
            mean = jnp.sum(acc_ref[...], axis=-1) * inv_hw      # (tb, C)
            h = jnp.dot(mean, w1_ref[...],
                        preferred_element_type=jnp.float32) + b1_ref[...]
            h = jnp.maximum(h, 0.0)                             # ReLU
            s = jnp.dot(h, w2_ref[...],
                        preferred_element_type=jnp.float32) + b2_ref[...]
            sig = jax.nn.sigmoid(s)                             # (tb, C)
            # replicate once to (tb, C, 128): C lands on sublanes like x, so
            # phase 1 needs no broadcast/relayout at all.
            scale_ref[...] = jnp.broadcast_to(sig[:, :, None], scale_ref.shape)

    # --------------------------- phase 1: scale ------------------------------
    @pl.when(phase == 1)
    def _scale_phase():
        scale = scale_ref[...]                                  # (tb, C, 128)
        for j in range(n_chunks):
            sl = slice(j * 128, (j + 1) * 128)
            if resident:
                start = pl.multiple_of(i * t_hw + j * 128, 128)
                xt = x_res[:, :, pl.ds(start, 128)]
            else:
                xt = x_ref[:, :, sl]
            o_ref[:, :, sl] = xt * scale


# ------------------------------ planning -------------------------------------

_MAX_T_HW = 4096  # keep the unrolled 128-lane chunk loop to <= 32 chunks


def _physical_vmem_bytes():
    try:
        info = pltpu.get_tpu_info()
        cap = int(getattr(info, "vmem_capacity_bytes", 0) or 0)
        if cap > 0:
            return cap
    except Exception:
        pass
    return 64 * 2 ** 20  # conservative default: v7x per-core VMEM


def _plan(B, C, MID, HW_pad, itemsize, budget):
    """Pick (resident, batch_tile, hw_tile) within the VMEM budget."""
    w_bytes = 2 * (2 * C * MID + MID + C) * itemsize       # resident weights
    slack = 2 * 2 ** 20
    lane_groups = HW_pad // 128
    hw_cands = sorted((128 * g for g in range(1, lane_groups + 1)
                       if lane_groups % g == 0 and 128 * g <= _MAX_T_HW),
                      reverse=True)

    def fits(tb, t_hw, resident):
        res = tb * C * HW_pad * itemsize if resident else 0
        small = 2 * tb * C * 128 * itemsize                 # acc + scale
        stream = 4 * tb * C * t_hw * itemsize               # in(x2) + out(x2)
        return res + small + stream + w_bytes + slack <= budget

    # prefer batch tiles <= B//2 so the "parallel" batch axis has >= 2 entries
    divs = [t for t in range(B, 0, -1) if B % t == 0]
    pref = list(dict.fromkeys([t for t in divs if t <= max(1, B // 2)] + divs))

    # 1) whole HW as a single streamed block: x stays in the pipeline buffer
    #    across both phases -> single HBM read, no scratch copy needed.
    if HW_pad <= _MAX_T_HW:
        for tb in pref:
            if fits(tb, HW_pad, resident=False):
                return False, tb, HW_pad
    # 2) resident VMEM copy of the batch-tile of x, streamed in HW tiles.
    for tb in pref:
        for t_hw in hw_cands:
            if t_hw < HW_pad and fits(tb, t_hw, resident=True):
                return True, tb, t_hw
    # 3) fallback: re-read x in the multiply phase (3x HBM traffic).
    for tb in pref:
        for t_hw in hw_cands:
            if t_hw < HW_pad and fits(tb, t_hw, resident=False):
                return False, tb, t_hw
    return False, 1, 128


# -------------------------------- wrapper -------------------------------------

def se_layer(x_nchw, w1, b1, w2, b2):
    """SELayer forward. x: (B, C, H, W) f32; w1: (C, C//r); w2: (C//r, C)."""
    B, C, H, W = x_nchw.shape
    MID = w1.shape[1]
    HW = H * W
    itemsize = 4  # f32

    x = x_nchw.reshape(B, C, HW)
    HW_pad = ((HW + 127) // 128) * 128
    if HW_pad != HW:  # lane-dense tiles for arbitrary spatial sizes
        x = jnp.pad(x, ((0, 0), (0, 0), (0, HW_pad - HW)))

    phys = _physical_vmem_bytes()
    budget = int(phys * 0.55)
    vmem_limit = int(min(max(phys * 3 // 4, 32 * 2 ** 20), 96 * 2 ** 20))

    resident, tb, t_hw = _plan(B, C, MID, HW_pad, itemsize, budget)
    n_b = B // tb
    n_t = HW_pad // t_hw

    if resident:
        # phase 0 streams tiles; phase 1 keeps the last tile's index so no
        # extra DMA is issued while reading from the resident VMEM copy.
        x_index_map = lambda b, p, i: (b, 0, i * (1 - p) + (n_t - 1) * p)
        scratch = [pltpu.VMEM((tb, C, HW_pad), jnp.float32)]
    else:
        x_index_map = lambda b, p, i: (b, 0, i)
        scratch = []
    scratch += [pltpu.VMEM((tb, C, 128), jnp.float32),   # running spatial sum
                pltpu.VMEM((tb, C, 128), jnp.float32)]   # replicated scales

    x_reads = 1 if (resident or n_t == 1) else 2
    cost = pl.CostEstimate(
        flops=int(2 * B * C * HW_pad + 4 * B * C * MID + 6 * B * C),
        transcendentals=int(B * C),
        bytes_accessed=int(itemsize * ((x_reads + 1) * B * C * HW_pad
                                       + 2 * C * MID + MID + C)),
    )

    out = pl.pallas_call(
        functools.partial(_se_fused_kernel, resident=resident,
                          inv_hw=1.0 / float(HW)),
        out_shape=jax.ShapeDtypeStruct((B, C, HW_pad), jnp.float32),
        grid=(n_b, 2, n_t),
        in_specs=[
            pl.BlockSpec((tb, C, t_hw), x_index_map),          # streamed x
            pl.BlockSpec((C, MID), lambda b, p, i: (0, 0)),    # resident FC1 w
            pl.BlockSpec((1, MID), lambda b, p, i: (0, 0)),    # resident FC1 b
            pl.BlockSpec((MID, C), lambda b, p, i: (0, 0)),    # resident FC2 w
            pl.BlockSpec((1, C), lambda b, p, i: (0, 0)),      # resident FC2 b
        ],
        # phase 0 pins the output to block (b, 0, 0) -> no garbage writebacks;
        # phase 1 walks the HW tiles with lane-dense stores.
        out_specs=pl.BlockSpec((tb, C, t_hw), lambda b, p, i: (b, 0, i * p)),
        scratch_shapes=scratch,
        compiler_params=pltpu.CompilerParams(
            dimension_semantics=("parallel", "arbitrary", "arbitrary"),
            vmem_limit_bytes=vmem_limit),
        cost_estimate=cost,
    )(x, w1, b1, w2, b2)

    if HW_pad != HW:
        out = out[:, :, :HW]
    return out.reshape(B, C, H, W)


# ---------------------------------- main --------------------------------------

if __name__ == "__main__":
    key = jax.random.PRNGKey(0)
    kx, k1, k2, k3, k4 = jax.random.split(key, 5)

    # shapes implied by SELayer(channel=128, reduction=8)
    B, C, H, W = 2, 128, 32, 32
    reduction = 8
    MID = C // reduction

    x = jax.random.normal(kx, (B, C, H, W), jnp.float32)

    # PyTorch nn.Linear-style init (uniform +-1/sqrt(fan_in)); weights stored
    # as (in, out) so the kernel can do y @ W directly.
    lim1 = 1.0 / math.sqrt(C)
    w1 = jax.random.uniform(k1, (C, MID), jnp.float32, -lim1, lim1)
    b1 = jax.random.uniform(k2, (1, MID), jnp.float32, -lim1, lim1)
    lim2 = 1.0 / math.sqrt(MID)
    w2 = jax.random.uniform(k3, (MID, C), jnp.float32, -lim2, lim2)
    b2 = jax.random.uniform(k4, (1, C), jnp.float32, -lim2, lim2)

    out = se_layer(x, w1, b1, w2, b2)
    jax.block_until_ready(out)

    # pure-JAX reference
    mean = jnp.mean(x, axis=(2, 3))                        # (B, C)
    h = jnp.maximum(mean @ w1 + b1, 0.0)
    y_ref = jax.nn.sigmoid(h @ w2 + b2)
    ref = x * y_ref[:, :, None, None]

    assert out.shape == (B, C, H, W), out.shape
    max_err = float(jnp.max(jnp.abs(out - ref)))
    assert max_err < 1e-4, f"max abs error {max_err}"
    print("KERNEL_OK")
</pallas_src>

<mosaic_0001>
module attributes {stable_mosaic.version = 11 : i64} {
  func.func @_se_fused_kernel(%arg0: i32, %arg1: i32, %arg2: i32, %arg3: memref<1x128x1024xf32, #tpu.memory_space<vmem>>, %arg4: memref<128x16xf32, #tpu.memory_space<vmem>>, %arg5: memref<1x16xf32, #tpu.memory_space<vmem>>, %arg6: memref<16x128xf32, #tpu.memory_space<vmem>>, %arg7: memref<1x128xf32, #tpu.memory_space<vmem>>, %arg8: memref<1x128x1024xf32, #tpu.memory_space<vmem>>, %arg9: memref<1x128x128xf32, #tpu.memory_space<vmem>>, %arg10: memref<1x128x128xf32, #tpu.memory_space<vmem>>) attributes {dimension_semantics = [#tpu.dimension_semantics<parallel>, #tpu.dimension_semantics<arbitrary>, #tpu.dimension_semantics<arbitrary>], iteration_bounds = array<i64: 2, 2, 1>, scalar_prefetch = 0 : i64, scratch_operands = 2 : i64, tpu.core_type = #tpu.core_type<tc>, window_params = [{transform_indices = @transform_0, window_bounds = array<i64: 1, 128, 1024>}, {pipeline_mode = #tpu.pipeline_mode<synchronous>, transform_indices = @transform_1, window_bounds = array<i64: 128, 16>}, {pipeline_mode = #tpu.pipeline_mode<synchronous>, transform_indices = @transform_2, window_bounds = array<i64: 1, 16>}, {pipeline_mode = #tpu.pipeline_mode<synchronous>, transform_indices = @transform_3, window_bounds = array<i64: 16, 128>}, {pipeline_mode = #tpu.pipeline_mode<synchronous>, transform_indices = @transform_4, window_bounds = array<i64: 1, 128>}, {transform_indices = @transform_5, window_bounds = array<i64: 1, 128, 1024>}]} {
    %c0_i32 = arith.constant 0 : i32
    %0 = arith.cmpi eq, %arg1, %c0_i32 : i32
    %1 = arith.extui %0 : i1 to i32
    %c0_i32_0 = arith.constant 0 : i32
    %2 = arith.cmpi ne, %1, %c0_i32_0 : i32
    scf.if %2 {
      %c0_i32_2 = arith.constant 0 : i32
      %6 = arith.cmpi eq, %arg2, %c0_i32_2 : i32
      %7 = arith.extui %6 : i1 to i32
      %c0_i32_3 = arith.constant 0 : i32
      %8 = arith.cmpi ne, %7, %c0_i32_3 : i32
      scf.if %8 {
        %cst = arith.constant 0.000000e+00 : f32
        %31 = vector.broadcast %cst : f32 to vector<1x128x128xf32>
        %c0_14 = arith.constant 0 : index
        %c0_15 = arith.constant 0 : index
        %c0_16 = arith.constant 0 : index
        %32 = vector.load %arg9[%c0_14, %c0_15, %c0_16] : memref<1x128x128xf32, #tpu.memory_space<vmem>>, vector<1x128x128xf32>
        tpu.vector_store %arg9[%c0_14, %c0_15, %c0_16], %31 {strides = array<i32>} : memref<1x128x128xf32, #tpu.memory_space<vmem>>, vector<1x128x128xf32>,
      } else {
      }
      %c0 = arith.constant 0 : index
      %c0_4 = arith.constant 0 : index
      %c0_5 = arith.constant 0 : index
      %9 = vector.load %arg3[%c0, %c0_4, %c0_5] : memref<1x128x1024xf32, #tpu.memory_space<vmem>>, vector<1x128x1024xf32>
      %c0_6 = arith.constant 0 : index
      %c0_7 = arith.constant 0 : index
      %c0_8 = arith.constant 0 : index
      %10 = vector.load %arg9[%c0_6, %c0_7, %c0_8] : memref<1x128x128xf32, #tpu.memory_space<vmem>>, vector<1x128x128xf32>
      %11 = vector.extract_strided_slice %9 {offsets = [0, 0, 0], sizes = [1, 128, 128], strides = [1, 1, 1]} : vector<1x128x1024xf32> to vector<1x128x128xf32>
      %12 = arith.addf %10, %11 : vector<1x128x128xf32>
      %13 = vector.extract_strided_slice %9 {offsets = [0, 0, 128], sizes = [1, 128, 128], strides = [1, 1, 1]} : vector<1x128x1024xf32> to vector<1x128x128xf32>
      %14 = arith.addf %12, %13 : vector<1x128x128xf32>
      %15 = vector.extract_strided_slice %9 {offsets = [0, 0, 256], sizes = [1, 128, 128], strides = [1, 1, 1]} : vector<1x128x1024xf32> to vector<1x128x128xf32>
      %16 = arith.addf %14, %15 : vector<1x128x128xf32>
      %17 = vector.extract_strided_slice %9 {offsets = [0, 0, 384], sizes = [1, 128, 128], strides = [1, 1, 1]} : vector<1x128x1024xf32> to vector<1x128x128xf32>
      %18 = arith.addf %16, %17 : vector<1x128x128xf32>
      %19 = vector.extract_strided_slice %9 {offsets = [0, 0, 512], sizes = [1, 128, 128], strides = [1, 1, 1]} : vector<1x128x1024xf32> to vector<1x128x128xf32>
      %20 = arith.addf %18, %19 : vector<1x128x128xf32>
      %21 = vector.extract_strided_slice %9 {offsets = [0, 0, 640], sizes = [1, 128, 128], strides = [1, 1, 1]} : vector<1x128x1024xf32> to vector<1x128x128xf32>
      %22 = arith.addf %20, %21 : vector<1x128x128xf32>
      %23 = vector.extract_strided_slice %9 {offsets = [0, 0, 768], sizes = [1, 128, 128], strides = [1, 1, 1]} : vector<1x128x1024xf32> to vector<1x128x128xf32>
      %24 = arith.addf %22, %23 : vector<1x128x128xf32>
      %25 = vector.extract_strided_slice %9 {offsets = [0, 0, 896], sizes = [1, 128, 128], strides = [1, 1, 1]} : vector<1x128x1024xf32> to vector<1x128x128xf32>
      %26 = arith.addf %24, %25 : vector<1x128x128xf32>
      %c0_9 = arith.constant 0 : index
      %c0_10 = arith.constant 0 : index
      %c0_11 = arith.constant 0 : index
      %27 = vector.load %arg9[%c0_9, %c0_10, %c0_11] : memref<1x128x128xf32, #tpu.memory_space<vmem>>, vector<1x128x128xf32>
      tpu.vector_store %arg9[%c0_9, %c0_10, %c0_11], %26 {strides = array<i32>} : memref<1x128x128xf32, #tpu.memory_space<vmem>>, vector<1x128x128xf32>,
      %c0_i32_12 = arith.constant 0 : i32
      %28 = arith.cmpi eq, %arg2, %c0_i32_12 : i32
      %29 = arith.extui %28 : i1 to i32
      %c0_i32_13 = arith.constant 0 : i32
      %30 = arith.cmpi ne, %29, %c0_i32_13 : i32
      scf.if %30 {
        %c0_14 = arith.constant 0 : index
        %c0_15 = arith.constant 0 : index
        %c0_16 = arith.constant 0 : index
        %31 = vector.load %arg9[%c0_14, %c0_15, %c0_16] : memref<1x128x128xf32, #tpu.memory_space<vmem>>, vector<1x128x128xf32>
        %cst = arith.constant dense<0.000000e+00> : vector<1x128xf32>
        %32 = vector.multi_reduction <add>, %31, %cst [2] : vector<1x128x128xf32> to vector<1x128xf32>
        %cst_17 = arith.constant 9.765625E-4 : f32
        %33 = vector.broadcast %cst_17 : f32 to vector<1x128xf32>
        %34 = arith.mulf %32, %33 : vector<1x128xf32>
        %c0_18 = arith.constant 0 : index
        %c0_19 = arith.constant 0 : index
        %35 = vector.load %arg4[%c0_18, %c0_19] : memref<128x16xf32, #tpu.memory_space<vmem>>, vector<128x16xf32>
        %cst_20 = arith.constant dense<0.000000e+00> : vector<1x16xf32>
        %36 = tpu.matmul %34, %35, %cst_20 {dimension_numbers = #tpu.dot_dimension_numbers<[1], [0], [0], [1], [0, 0, 1, 1], [], []>} : vector<1x128xf32>, vector<128x16xf32>, vector<1x16xf32> -> vector<1x16xf32>
        %c0_21 = arith.constant 0 : index
        %c0_22 = arith.constant 0 : index
        %37 = vector.load %arg5[%c0_21, %c0_22] : memref<1x16xf32, #tpu.memory_space<vmem>>, vector<1x16xf32>
        %38 = arith.addf %36, %37 : vector<1x16xf32>
        %cst_23 = arith.constant 0.000000e+00 : f32
        %39 = vector.broadcast %cst_23 : f32 to vector<1x16xf32>
        %40 = arith.maximumf %38, %39 : vector<1x16xf32>
        %c0_24 = arith.constant 0 : index
        %c0_25 = arith.constant 0 : index
        %41 = vector.load %arg6[%c0_24, %c0_25] : memref<16x128xf32, #tpu.memory_space<vmem>>, vector<16x128xf32>
        %cst_26 = arith.constant dense<0.000000e+00> : vector<1x128xf32>
        %42 = tpu.matmul %40, %41, %cst_26 {dimension_numbers = #tpu.dot_dimension_numbers<[1], [0], [0], [1], [0, 0, 1, 1], [], []>} : vector<1x16xf32>, vector<16x128xf32>, vector<1x128xf32> -> vector<1x128xf32>
        %c0_27 = arith.constant 0 : index
        %c0_28 = arith.constant 0 : index
        %43 = vector.load %arg7[%c0_27, %c0_28] : memref<1x128xf32, #tpu.memory_space<vmem>>, vector<1x128xf32>
        %44 = arith.addf %42, %43 : vector<1x128xf32>
        %45 = arith.negf %44 : vector<1x128xf32>
        %46 = math.exp %45 : vector<1x128xf32>
        %cst_29 = arith.constant 1.000000e+00 : f32
        %47 = vector.broadcast %cst_29 : f32 to vector<1x128xf32>
        %48 = arith.addf %47, %46 : vector<1x128xf32>
        %49 = arith.divf %47, %48 : vector<1x128xf32>
        %50 = vector.shape_cast %49 : vector<1x128xf32> to vector<1x128x1xf32>
        %51 = vector.shape_cast %50 : vector<1x128x1xf32> to vector<1x128x1xf32>
        %52 = vector.broadcast %51 : vector<1x128x1xf32> to vector<1x128x128xf32>
        %c0_30 = arith.constant 0 : index
        %c0_31 = arith.constant 0 : index
        %c0_32 = arith.constant 0 : index
        %53 = vector.load %arg10[%c0_30, %c0_31, %c0_32] : memref<1x128x128xf32, #tpu.memory_space<vmem>>, vector<1x128x128xf32>
        tpu.vector_store %arg10[%c0_30, %c0_31, %c0_32], %52 {strides = array<i32>} : memref<1x128x128xf32, #tpu.memory_space<vmem>>, vector<1x128x128xf32>,
      } else {
      }
    } else {
    }
    %c1_i32 = arith.constant 1 : i32
    %3 = arith.cmpi eq, %arg1, %c1_i32 : i32
    %4 = arith.extui %3 : i1 to i32
    %c0_i32_1 = arith.constant 0 : i32
    %5 = arith.cmpi ne, %4, %c0_i32_1 : i32
    scf.if %5 {
      %c0 = arith.constant 0 : index
      %c0_2 = arith.constant 0 : index
      %c0_3 = arith.constant 0 : index
      %6 = vector.load %arg10[%c0, %c0_2, %c0_3] : memref<1x128x128xf32, #tpu.memory_space<vmem>>, vector<1x128x128xf32>
      %c0_4 = arith.constant 0 : index
      %c0_5 = arith.constant 0 : index
      %c0_6 = arith.constant 0 : index
      %7 = vector.load %arg3[%c0_4, %c0_5, %c0_6] : memref<1x128x1024xf32, #tpu.memory_space<vmem>>, vector<1x128x128xf32>
      %8 = arith.mulf %7, %6 : vector<1x128x128xf32>
      %c0_7 = arith.constant 0 : index
      %c0_8 = arith.constant 0 : index
      %c0_9 = arith.constant 0 : index
      %9 = vector.load %arg8[%c0_7, %c0_8, %c0_9] : memref<1x128x1024xf32, #tpu.memory_space<vmem>>, vector<1x128x128xf32>
      tpu.vector_store %arg8[%c0_7, %c0_8, %c0_9], %8 {strides = array<i32>} : memref<1x128x1024xf32, #tpu.memory_space<vmem>>, vector<1x128x128xf32>,
      %c0_10 = arith.constant 0 : index
      %c0_11 = arith.constant 0 : index
      %c128 = arith.constant 128 : index
      %10 = vector.load %arg3[%c0_10, %c0_11, %c128] : memref<1x128x1024xf32, #tpu.memory_space<vmem>>, vector<1x128x128xf32>
      %11 = arith.mulf %10, %6 : vector<1x128x128xf32>
      %c0_12 = arith.constant 0 : index
      %c0_13 = arith.constant 0 : index
      %c128_14 = arith.constant 128 : index
      %12 = vector.load %arg8[%c0_12, %c0_13, %c128_14] : memref<1x128x1024xf32, #tpu.memory_space<vmem>>, vector<1x128x128xf32>
      tpu.vector_store %arg8[%c0_12, %c0_13, %c128_14], %11 {strides = array<i32>} : memref<1x128x1024xf32, #tpu.memory_space<vmem>>, vector<1x128x128xf32>,
      %c0_15 = arith.constant 0 : index
      %c0_16 = arith.constant 0 : index
      %c256 = arith.constant 256 : index
      %13 = vector.load %arg3[%c0_15, %c0_16, %c256] : memref<1x128x1024xf32, #tpu.memory_space<vmem>>, vector<1x128x128xf32>
      %14 = arith.mulf %13, %6 : vector<1x128x128xf32>
      %c0_17 = arith.constant 0 : index
      %c0_18 = arith.constant 0 : index
      %c256_19 = arith.constant 256 : index
      %15 = vector.load %arg8[%c0_17, %c0_18, %c256_19] : memref<1x128x1024xf32, #tpu.memory_space<vmem>>, vector<1x128x128xf32>
      tpu.vector_store %arg8[%c0_17, %c0_18, %c256_19], %14 {strides = array<i32>} : memref<1x128x1024xf32, #tpu.memory_space<vmem>>, vector<1x128x128xf32>,
      %c0_20 = arith.constant 0 : index
      %c0_21 = arith.constant 0 : index
      %c384 = arith.constant 384 : index
      %16 = vector.load %arg3[%c0_20, %c0_21, %c384] : memref<1x128x1024xf32, #tpu.memory_space<vmem>>, vector<1x128x128xf32>
      %17 = arith.mulf %16, %6 : vector<1x128x128xf32>
      %c0_22 = arith.constant 0 : index
      %c0_23 = arith.constant 0 : index
      %c384_24 = arith.constant 384 : index
      %18 = vector.load %arg8[%c0_22, %c0_23, %c384_24] : memref<1x128x1024xf32, #tpu.memory_space<vmem>>, vector<1x128x128xf32>
      tpu.vector_store %arg8[%c0_22, %c0_23, %c384_24], %17 {strides = array<i32>} : memref<1x128x1024xf32, #tpu.memory_space<vmem>>, vector<1x128x128xf32>,
      %c0_25 = arith.constant 0 : index
      %c0_26 = arith.constant 0 : index
      %c512 = arith.constant 512 : index
      %19 = vector.load %arg3[%c0_25, %c0_26, %c512] : memref<1x128x1024xf32, #tpu.memory_space<vmem>>, vector<1x128x128xf32>
      %20 = arith.mulf %19, %6 : vector<1x128x128xf32>
      %c0_27 = arith.constant 0 : index
      %c0_28 = arith.constant 0 : index
      %c512_29 = arith.constant 512 : index
      %21 = vector.load %arg8[%c0_27, %c0_28, %c512_29] : memref<1x128x1024xf32, #tpu.memory_space<vmem>>, vector<1x128x128xf32>
      tpu.vector_store %arg8[%c0_27, %c0_28, %c512_29], %20 {strides = array<i32>} : memref<1x128x1024xf32, #tpu.memory_space<vmem>>, vector<1x128x128xf32>,
      %c0_30 = arith.constant 0 : index
      %c0_31 = arith.constant 0 : index
      %c640 = arith.constant 640 : index
      %22 = vector.load %arg3[%c0_30, %c0_31, %c640] : memref<1x128x1024xf32, #tpu.memory_space<vmem>>, vector<1x128x128xf32>
      %23 = arith.mulf %22, %6 : vector<1x128x128xf32>
      %c0_32 = arith.constant 0 : index
      %c0_33 = arith.constant 0 : index
      %c640_34 = arith.constant 640 : index
      %24 = vector.load %arg8[%c0_32, %c0_33, %c640_34] : memref<1x128x1024xf32, #tpu.memory_space<vmem>>, vector<1x128x128xf32>
      tpu.vector_store %arg8[%c0_32, %c0_33, %c640_34], %23 {strides = array<i32>} : memref<1x128x1024xf32, #tpu.memory_space<vmem>>, vector<1x128x128xf32>,
      %c0_35 = arith.constant 0 : index
      %c0_36 = arith.constant 0 : index
      %c768 = arith.constant 768 : index
      %25 = vector.load %arg3[%c0_35, %c0_36, %c768] : memref<1x128x1024xf32, #tpu.memory_space<vmem>>, vector<1x128x128xf32>
      %26 = arith.mulf %25, %6 : vector<1x128x128xf32>
      %c0_37 = arith.constant 0 : index
      %c0_38 = arith.constant 0 : index
      %c768_39 = arith.constant 768 : index
      %27 = vector.load %arg8[%c0_37, %c0_38, %c768_39] : memref<1x128x1024xf32, #tpu.memory_space<vmem>>, vector<1x128x128xf32>
      tpu.vector_store %arg8[%c0_37, %c0_38, %c768_39], %26 {strides = array<i32>} : memref<1x128x1024xf32, #tpu.memory_space<vmem>>, vector<1x128x128xf32>,
      %c0_40 = arith.constant 0 : index
      %c0_41 = arith.constant 0 : index
      %c896 = arith.constant 896 : index
      %28 = vector.load %arg3[%c0_40, %c0_41, %c896] : memref<1x128x1024xf32, #tpu.memory_space<vmem>>, vector<1x128x128xf32>
      %29 = arith.mulf %28, %6 : vector<1x128x128xf32>
      %c0_42 = arith.constant 0 : index
      %c0_43 = arith.constant 0 : index
      %c896_44 = arith.constant 896 : index
      %30 = vector.load %arg8[%c0_42, %c0_43, %c896_44] : memref<1x128x1024xf32, #tpu.memory_space<vmem>>, vector<1x128x128xf32>
      tpu.vector_store %arg8[%c0_42, %c0_43, %c896_44], %29 {strides = array<i32>} : memref<1x128x1024xf32, #tpu.memory_space<vmem>>, vector<1x128x128xf32>,
    } else {
    }
    return
  }
  func.func @transform_0(%arg0: i32, %arg1: i32, %arg2: i32) -> (i32, i32, i32) {
    %c0_i32 = arith.constant 0 : i32
    %c0_i32_0 = arith.constant 0 : i32
    return %arg0, %c0_i32, %arg2 : i32, i32, i32
  }
  func.func @transform_1(%arg0: i32, %arg1: i32, %arg2: i32) -> (i32, i32) {
    %c0_i32 = arith.constant 0 : i32
    %c0_i32_0 = arith.constant 0 : i32
    %c0_i32_1 = arith.constant 0 : i32
    return %c0_i32, %c0_i32_0 : i32, i32
  }
  func.func @transform_2(%arg0: i32, %arg1: i32, %arg2: i32) -> (i32, i32) {
    %c0_i32 = arith.constant 0 : i32
    %c0_i32_0 = arith.constant 0 : i32
    %c0_i32_1 = arith.constant 0 : i32
    return %c0_i32, %c0_i32_0 : i32, i32
  }
  func.func @transform_3(%arg0: i32, %arg1: i32, %arg2: i32) -> (i32, i32) {
    %c0_i32 = arith.constant 0 : i32
    %c0_i32_0 = arith.constant 0 : i32
    %c0_i32_1 = arith.constant 0 : i32
    return %c0_i32, %c0_i32_0 : i32, i32
  }
  func.func @transform_4(%arg0: i32, %arg1: i32, %arg2: i32) -> (i32, i32) {
    %c0_i32 = arith.constant 0 : i32
    %c0_i32_0 = arith.constant 0 : i32
    %c0_i32_1 = arith.constant 0 : i32
    return %c0_i32, %c0_i32_0 : i32, i32
  }
  func.func @transform_5(%arg0: i32, %arg1: i32, %arg2: i32) -> (i32, i32, i32) {
    %0 = arith.muli %arg2, %arg1 : i32
    %c0_i32 = arith.constant 0 : i32
    %c0_i32_0 = arith.constant 0 : i32
    return %arg0, %c0_i32, %0 : i32, i32, i32
  }
}

</mosaic_0001>

<llo_original>
// kernel: tpu_custom_call.1
$region0: #{tpu_custom_call.1}
  #allocation0 [shape = 'u32[]', space=smem, size = 0x4, offset = 0x4, fixed_abs, tag = 'smem constant byte address 0x4 - core index']
  #allocation1 [shape = 'u32[144,128]{1,0:T(1,128)}', space=vmem, size = 0x12000, scoped, tag = 'internal scratch']
  #allocation2 [shape = 'f32[1,128,128]{2,1,0:T(8,128)}', space=vmem, size = 0x10000, scoped, tag = 'scratch operand']
  #allocation3 [shape = 'f32[1,128,128]{2,1,0:T(8,128)}', space=vmem, size = 0x10000, scoped, tag = 'scratch operand']
  %s0 = inlined_call_operand.hbm [shape: f32[2,128,1024], index: 0, kind: input, shape index: {}]
  %s1 = inlined_call_operand.vmem [shape: f32[128,16], index: 1, kind: input, shape index: {}]
  %s2 = inlined_call_operand.vmem [shape: f32[1,16], index: 2, kind: input, shape index: {}]
  %s3 = inlined_call_operand.vmem [shape: f32[16,128], index: 3, kind: input, shape index: {}]
  %s4 = inlined_call_operand.vmem [shape: f32[1,128], index: 4, kind: input, shape index: {}]
  %s5 = inlined_call_operand.hbm [shape: f32[2,128,1024], index: 5, kind: output, shape index: {}]
  %s6 = sld [smem:[#allocation0]]
  $region73: #{tpu_custom_call.1} parent=0
    _
  %s8 = ssub.s32 1, %s6
  %s9 = scalar_select 0, %s8, %s6
  $region1: #{tpu_custom_call.1} parent=0
    #allocation4 [shape = 'u8[1048576]{0}', space=vmem, size = 0x100000, scoped, tag = 'input window, operand 0']
    #allocation5 [shape = 's32[2]{0}', space=sflag, size = 0x8, scoped, tag = 'scoped memory for tpu_custom_call.1']
    #allocation6 [shape = 's32[2]{0}', space=sflag, size = 0x8, scoped, tag = 'scoped memory for tpu_custom_call.1']
    #allocation7 [shape = 'u8[1048576]{0}', space=vmem, size = 0x100000, scoped, tag = 'output window, operand 0']
    %10 = vsyncpa [#allocation5], 0
    %s11 = scalar_lea.sflag [#allocation5], 1
    %12 = vsyncpa %s11, 0
    %13 = vsyncpa [#allocation6], 0
    %s14 = scalar_lea.sflag [#allocation6], 1
    %15 = vsyncpa %s14, 0
    loop: start=0, step=1, limit=6
    $region2: #{tpu_custom_call.1} parent=1 // loop_pre_header
      _
    $region3: #{tpu_custom_call.1} parent=1 // loop_header
      %s17 = sphi 0, %s21
      %p18 = scmp.ge.s32.totalorder %s17, 6
      %s24 = sphi 0, %s43
      %s25 = sphi 0, %s39
      %s26 = sphi 0, %s35
      %s27 = sphi 0, %s24
      %s28 = sphi 0, %s25
      %s29 = sphi 0, %s26
      %s30 = sphi 0, %s27
      %s31 = sphi 0, %s28
      %s32 = sphi 0, %s29
      %s48 = sphi 0, %s50
      %s51 = sphi 0, %s48
      %s52 = sphi 0, %s51
      %s68 = sphi 0, %s52
      %s72 = sphi 0, %s72
      %s74 = sphi 0, %s72
      %s75 = sphi 0, %s74
      %s89 = sphi 0, %s75
      %s93 = sphi 0, %s93
      %s95 = sphi 0, %s93
      %s96 = sphi 0, %s95
      %s110 = sphi 0, %s96
      %s114 = sphi 0, %s114
      %s116 = sphi 0, %s114
      %s117 = sphi 0, %s116
      %s131 = sphi 0, %s117
      %s135 = sphi 0, %s135
      %s137 = sphi 0, %s135
      %s138 = sphi 0, %s137
      %s152 = sphi 0, %s138
      %s162 = sphi 0, %s164
      %s165 = sphi 0, %s162
      %s166 = sphi 0, %s165
      %s182 = sphi 0, %s166
    $region4: #{tpu_custom_call.1} parent=1 // loop_header_branch
      %20 = sbr.rel (%p18) target = $region8
    $region5: #{tpu_custom_call.1} parent=1 // loop_body
      %s22 = ssub.s32 %s17, 1
      %s23 = ssub.s32 %s17, 2
      %s33 = sadd.s32 1, %s26
      %p34 = scmp.ge.s32.totalorder %s33, 1
      %s35 = scalar_select %p34, 0, %s33
      %s36 = sadd.s32 1, %s25
      %s37 = scalar_select %p34, %s36, %s25
      %p38 = scmp.ge.s32.totalorder %s37, 2
      %s39 = scalar_select %p38, 0, %s37
      %s40 = sadd.s32 1, %s24
      %s41 = scalar_select %p38, %s40, %s24
      %p42 = scmp.ge.s32.totalorder %s41, 2
      %s43 = scalar_select %p42, 0, %s41
      %s44 = ssub.s32 %s24, %s43
      %s45 = ssub.s32 %s26, %s35
      %s46 = sor.u32 %s44, %s45
      %p47 = scmp.eq.s32.totalorder %s46, 0
      %s49 = sadd.s32 %s48, 1
      %s50 = scalar_select %p47, %s48, %s49
      %p53 = pneg %p47
      %p54 = scmp.eq.s32.totalorder %s17, 3
      %p55 = por %p53, %p54
      %p56 = scmp.ne.s32.totalorder %s48, %s51
      %p57 = scmp.eq.s32.totalorder %s17, 0
      %p58 = por %p56, %p57
      %p59 = scmp.ne.s32.totalorder %s48, %s51
      %p60 = scmp.eq.s32.totalorder %s22, 3
      %p61 = por %p59, %p60
      %p62 = scmp.ne.s32.totalorder %s51, %s52
      %p63 = scmp.eq.s32.totalorder %s22, 0
      %p64 = por %p62, %p63
      %p65 = scmp.ne.s32.totalorder %s51, %s52
      %p66 = scmp.eq.s32.totalorder %s23, 3
      %p67 = por %p65, %p66
      %p69 = scmp.ne.s32.totalorder %s52, %s68
      %p70 = scmp.eq.s32.totalorder %s23, 0
      %p71 = por %p69, %p70
      %s73 = sadd.s32 %s72, 1
      %p76 = scmp.eq.s32.totalorder %s17, 3
      %p77 = scmp.ne.s32.totalorder %s72, %s74
      %p78 = scmp.eq.s32.totalorder %s17, 0
      %p79 = por %p77, %p78
      %p80 = scmp.ne.s32.totalorder %s72, %s74
      %p81 = scmp.eq.s32.totalorder %s22, 3
      %p82 = por %p80, %p81
      %p83 = scmp.ne.s32.totalorder %s74, %s75
      %p84 = scmp.eq.s32.totalorder %s22, 0
      %p85 = por %p83, %p84
      %p86 = scmp.ne.s32.totalorder %s74, %s75
      %p87 = scmp.eq.s32.totalorder %s23, 3
      %p88 = por %p86, %p87
      %p90 = scmp.ne.s32.totalorder %s75, %s89
      %p91 = scmp.eq.s32.totalorder %s23, 0
      %p92 = por %p90, %p91
      %s94 = sadd.s32 %s93, 1
      %p97 = scmp.eq.s32.totalorder %s17, 3
      %p98 = scmp.ne.s32.totalorder %s93, %s95
      %p99 = scmp.eq.s32.totalorder %s17, 0
      %p100 = por %p98, %p99
      %p101 = scmp.ne.s32.totalorder %s93, %s95
      %p102 = scmp.eq.s32.totalorder %s22, 3
      %p103 = por %p101, %p102
      %p104 = scmp.ne.s32.totalorder %s95, %s96
      %p105 = scmp.eq.s32.totalorder %s22, 0
      %p106 = por %p104, %p105
      %p107 = scmp.ne.s32.totalorder %s95, %s96
      %p108 = scmp.eq.s32.totalorder %s23, 3
      %p109 = por %p107, %p108
      %p111 = scmp.ne.s32.totalorder %s96, %s110
      %p112 = scmp.eq.s32.totalorder %s23, 0
      %p113 = por %p111, %p112
      %s115 = sadd.s32 %s114, 1
      %p118 = scmp.eq.s32.totalorder %s17, 3
      %p119 = scmp.ne.s32.totalorder %s114, %s116
      %p120 = scmp.eq.s32.totalorder %s17, 0
      %p121 = por %p119, %p120
      %p122 = scmp.ne.s32.totalorder %s114, %s116
      %p123 = scmp.eq.s32.totalorder %s22, 3
      %p124 = por %p122, %p123
      %p125 = scmp.ne.s32.totalorder %s116, %s117
      %p126 = scmp.eq.s32.totalorder %s22, 0
      %p127 = por %p125, %p126
      %p128 = scmp.ne.s32.totalorder %s116, %s117
      %p129 = scmp.eq.s32.totalorder %s23, 3
      %p130 = por %p128, %p129
      %p132 = scmp.ne.s32.totalorder %s117, %s131
      %p133 = scmp.eq.s32.totalorder %s23, 0
      %p134 = por %p132, %p133
      %s136 = sadd.s32 %s135, 1
      %p139 = scmp.eq.s32.totalorder %s17, 3
      %p140 = scmp.ne.s32.totalorder %s135, %s137
      %p141 = scmp.eq.s32.totalorder %s17, 0
      %p142 = por %p140, %p141
      %p143 = scmp.ne.s32.totalorder %s135, %s137
      %p144 = scmp.eq.s32.totalorder %s22, 3
      %p145 = por %p143, %p144
      %p146 = scmp.ne.s32.totalorder %s137, %s138
      %p147 = scmp.eq.s32.totalorder %s22, 0
      %p148 = por %p146, %p147
      %p149 = scmp.ne.s32.totalorder %s137, %s138
      %p150 = scmp.eq.s32.totalorder %s23, 3
      %p151 = por %p149, %p150
      %p153 = scmp.ne.s32.totalorder %s138, %s152
      %p154 = scmp.eq.s32.totalorder %s23, 0
      %p155 = por %p153, %p154
      %s156 = smul.u32 %s26, %s25
      %s157 = smul.u32 %s35, %s39
      %s158 = ssub.s32 %s24, %s43
      %s159 = ssub.s32 %s156, %s157
      %s160 = sor.u32 %s158, %s159
      %p161 = scmp.eq.s32.totalorder %s160, 0
      %s163 = sadd.s32 %s162, 1
      %s164 = scalar_select %p161, %s162, %s163
      %p167 = pneg %p161
      %p168 = scmp.eq.s32.totalorder %s17, 3
      %p169 = por %p167, %p168
      %p170 = scmp.ne.s32.totalorder %s162, %s165
      %p171 = scmp.eq.s32.totalorder %s17, 0
      %p172 = por %p170, %p171
      %p173 = scmp.ne.s32.totalorder %s162, %s165
      %p174 = scmp.eq.s32.totalorder %s22, 3
      %p175 = por %p173, %p174
      %p176 = scmp.ne.s32.totalorder %s165, %s166
      %p177 = scmp.eq.s32.totalorder %s22, 0
      %p178 = por %p176, %p177
      %p179 = scmp.ne.s32.totalorder %s165, %s166
      %p180 = scmp.eq.s32.totalorder %s23, 3
      %p181 = por %p179, %p180
      %p183 = scmp.ne.s32.totalorder %s166, %s182
      %p184 = scmp.eq.s32.totalorder %s23, 0
      %p185 = por %p183, %p184
      %p186 = scmp.le.s32.totalorder 1, %s17
      %p187 = scmp.lt.s32.totalorder %s17, 5
      %p188 = pnand %p186, %p187
      %p189 = pneg %p188
      // Predicated region
      $region9: #{tpu_custom_call.1} parent=5 // pred_check
        _
      $region10: #{tpu_custom_call.1} parent=5 // pred_check_branch
        %191 = sbr.rel (%p188) target = $region12
      $region11: #{tpu_custom_call.1} parent=5 // pred_region
        %s192 = ssub.s32 %s17, 1
        // Predicated region
        $region13: #{tpu_custom_call.1} parent=11 // pred_check
          %p193 = pneg %p85
        $region14: #{tpu_custom_call.1} parent=11 // pred_check_branch
          %195 = sbr.rel (%p193) target = $region16
        $region15: #{tpu_custom_call.1} parent=11 // pred_region
          _
        $region16: #{tpu_custom_call.1} parent=11 // pred_fallthru
          _
        // Predicated region
        $region17: #{tpu_custom_call.1} parent=11 // pred_check
          %p196 = pneg %p106
        $region18: #{tpu_custom_call.1} parent=11 // pred_check_branch
          %198 = sbr.rel (%p196) target = $region20
        $region19: #{tpu_custom_call.1} parent=11 // pred_region
          _
        $region20: #{tpu_custom_call.1} parent=11 // pred_fallthru
          _
        // Predicated region
        $region21: #{tpu_custom_call.1} parent=11 // pred_check
          %p199 = pneg %p127
        $region22: #{tpu_custom_call.1} parent=11 // pred_check_branch
          %201 = sbr.rel (%p199) target = $region24
        $region23: #{tpu_custom_call.1} parent=11 // pred_region
          _
        $region24: #{tpu_custom_call.1} parent=11 // pred_fallthru
          _
        // Predicated region
        $region25: #{tpu_custom_call.1} parent=11 // pred_check
          %p202 = pneg %p148
        $region26: #{tpu_custom_call.1} parent=11 // pred_check_branch
          %204 = sbr.rel (%p202) target = $region28
        $region27: #{tpu_custom_call.1} parent=11 // pred_region
          _
        $region28: #{tpu_custom_call.1} parent=11 // pred_fallthru
          _
      $region12: #{tpu_custom_call.1} parent=5 // pred_fallthru
        _
      %p205 = scmp.lt.s32.totalorder %s17, 4
      // Predicated region
      $region29: #{tpu_custom_call.1} parent=5 // pred_check
        %p206 = pneg %p205
      $region30: #{tpu_custom_call.1} parent=5 // pred_check_branch
        %208 = sbr.rel (%p206) target = $region32
      $region31: #{tpu_custom_call.1} parent=5 // pred_region
        // Predicated region
        $region33: #{tpu_custom_call.1} parent=31 // pred_check
          %p209 = pneg %p58
        $region34: #{tpu_custom_call.1} parent=31 // pred_check_branch
          %211 = sbr.rel (%p209) target = $region36
        $region35: #{tpu_custom_call.1} parent=31 // pred_region
          %s212 = sand.u32 %s48, 1
          %s213 = scalar_lea.sflag [#allocation5], %s212
          %s214 = sand.u32 %s48, 1
          %s215 = smul.addr %s214, 1024
          %s216 = scalar_lea.vmem [#allocation4], %s215
          %s217 = smul.u32 8, %s26
          %s219 = ssub.s32 16384, 16384
          %220 = vsyncadd %s213, %s219
          %s221 = smul.addr %s24, 128
          %s222 = sadd.s32 %s217, %s221
          %s223 = smul.addr %s222, 128
          %s224 = scalar_lea.hbm %s0, %s223
          %s225 = sshll.u32 %s216, 4
          %s226 = int_to_ptr.vmem [resolvable:$true] %s225
          %231 = dma.hbm_to_vmem [thread:$0]  %s224, 16384, %s226, %s213, 1024, 1024, 64
        $region36: #{tpu_custom_call.1} parent=31 // pred_fallthru
          _
      $region32: #{tpu_custom_call.1} parent=5 // pred_fallthru
        _
      %p232 = scmp.le.s32.totalorder 1, %s17
      %p233 = scmp.lt.s32.totalorder %s17, 5
      %p234 = pnand %p232, %p233
      %p235 = pneg %p234
      // Predicated region
      $region37: #{tpu_custom_call.1} parent=5 // pred_check
        _
      $region38: #{tpu_custom_call.1} parent=5 // pred_check_branch
        %237 = sbr.rel (%p234) target = $region40
      $region39: #{tpu_custom_call.1} parent=5 // pred_region
        %s238 = ssub.s32 %s17, 1
        %s239 = sand.u32 %s51, 1
        %s240 = scalar_lea.sflag [#allocation5], %s239
        %s241 = sand.u32 %s51, 1
        %s242 = smul.addr %s241, 1024
        %s243 = scalar_lea.vmem [#allocation4], %s242
        // Predicated region
        $region41: #{tpu_custom_call.1} parent=39 // pred_check
          %p244 = pneg %p64
        $region42: #{tpu_custom_call.1} parent=39 // pred_check_branch
          %246 = sbr.rel (%p244) target = $region44
        $region43: #{tpu_custom_call.1} parent=39 // pred_region
          %247 = dma.done %s240, 16384
        $region44: #{tpu_custom_call.1} parent=39 // pred_fallthru
          _
        %s248 = sand.u32 %s51, 1
        %s249 = scalar_lea.sflag [#allocation5], %s248
        %s250 = sand.u32 %s51, 1
        %s251 = smul.addr %s250, 1024
        %s252 = scalar_lea.vmem [#allocation4], %s251
        %p253 = pneg %p64
        %p254 = pneg %p61
        %p255 = pneg %p85
        %p256 = pneg %p82
        %p257 = pneg %p106
        %p258 = pneg %p103
        %p259 = pneg %p127
        %p260 = pneg %p124
        %p261 = pneg %p148
        %p262 = pneg %p145
        %p263 = pneg %p178
        %p264 = pneg %p175
        %s265 = sand.u32 %s165, 1
        %s266 = scalar_lea.sflag [#allocation6], %s265
        %s267 = sand.u32 %s165, 1
        %s268 = smul.addr %s267, 1024
        %s269 = scalar_lea.vmem [#allocation7], %s268
        %s270 = smul.u32 8, %s29
        %s271 = smul.u32 %s29, %s28
        %s272 = smul.u32 8, %s271
        %p273 = scmp.eq.s32.totalorder %s28, 0
        // Predicated region
        $region45: #{tpu_custom_call.1} parent=39 // pred_check
          %p274 = pneg %p273
        $region46: #{tpu_custom_call.1} parent=39 // pred_check_branch
          %276 = sbr.rel (%p274) target = $region48
        $region47: #{tpu_custom_call.1} parent=39 // pred_region
          %p277 = scmp.eq.s32.totalorder %s29, 0
          // Predicated region
          $region49: #{tpu_custom_call.1} parent=47 // pred_check
            %p278 = pneg %p277
          $region50: #{tpu_custom_call.1} parent=47 // pred_check_branch
            %280 = sbr.rel (%p278) target = $region52
          $region51: #{tpu_custom_call.1} parent=47 // pred_region
            %281 = vst [vmem:[#allocation2] sm:$0xff] 0.0
            %282 = vst [vmem:[#allocation2 + $0x8] sm:$0xff] 0.0
            %283 = vst [vmem:[#allocation2 + $0x10] sm:$0xff] 0.0
            %284 = vst [vmem:[#allocation2 + $0x18] sm:$0xff] 0.0
            %285 = vst [vmem:[#allocation2 + $0x20] sm:$0xff] 0.0
            %286 = vst [vmem:[#allocation2 + $0x28] sm:$0xff] 0.0
            %287 = vst [vmem:[#allocation2 + $0x30] sm:$0xff] 0.0
            %288 = vst [vmem:[#allocation2 + $0x38] sm:$0xff] 0.0
            %289 = vst [vmem:[#allocation2 + $0x40] sm:$0xff] 0.0
            %290 = vst [vmem:[#allocation2 + $0x48] sm:$0xff] 0.0
            %291 = vst [vmem:[#allocation2 + $0x50] sm:$0xff] 0.0
            %292 = vst [vmem:[#allocation2 + $0x58] sm:$0xff] 0.0
            %293 = vst [vmem:[#allocation2 + $0x60] sm:$0xff] 0.0
            %294 = vst [vmem:[#allocation2 + $0x68] sm:$0xff] 0.0
            %295 = vst [vmem:[#allocation2 + $0x70] sm:$0xff] 0.0
            %296 = vst [vmem:[#allocation2 + $0x78] sm:$0xff] 0.0
          $region52: #{tpu_custom_call.1} parent=47 // pred_fallthru
            _
          %v297 = vld [vmem:[%s243] sm:$0xff]
          %v298 = vld [vmem:[%s243 + $0x8] sm:$0xff]
          %v299 = vld [vmem:[%s243 + $0x10] sm:$0xff]
          %v300 = vld [vmem:[%s243 + $0x18] sm:$0xff]
          %v301 = vld [vmem:[%s243 + $0x20] sm:$0xff]
          %v302 = vld [vmem:[%s243 + $0x28] sm:$0xff]
          %v303 = vld [vmem:[%s243 + $0x30] sm:$0xff]
          %v304 = vld [vmem:[%s243 + $0x38] sm:$0xff]
          %v305 = vld [vmem:[%s243 + $0x40] sm:$0xff]
          %v306 = vld [vmem:[%s243 + $0x48] sm:$0xff]
          %v307 = vld [vmem:[%s243 + $0x50] sm:$0xff]
          %v308 = vld [vmem:[%s243 + $0x58] sm:$0xff]
          %v309 = vld [vmem:[%s243 + $0x60] sm:$0xff]
          %v310 = vld [vmem:[%s243 + $0x68] sm:$0xff]
          %v311 = vld [vmem:[%s243 + $0x70] sm:$0xff]
          %v312 = vld [vmem:[%s243 + $0x78] sm:$0xff]
          %v313 = vld [vmem:[%s243 + $0x80] sm:$0xff]
          %v314 = vld [vmem:[%s243 + $0x88] sm:$0xff]
          %v315 = vld [vmem:[%s243 + $0x90] sm:$0xff]
          %v316 = vld [vmem:[%s243 + $0x98] sm:$0xff]
          %v317 = vld [vmem:[%s243 + $0xa0] sm:$0xff]
          %v318 = vld [vmem:[%s243 + $0xa8] sm:$0xff]
          %v319 = vld [vmem:[%s243 + $0xb0] sm:$0xff]
          %v320 = vld [vmem:[%s243 + $0xb8] sm:$0xff]
          %v321 = vld [vmem:[%s243 + $0xc0] sm:$0xff]
          %v322 = vld [vmem:[%s243 + $0xc8] sm:$0xff]
          %v323 = vld [vmem:[%s243 + $0xd0] sm:$0xff]
          %v324 = vld [vmem:[%s243 + $0xd8] sm:$0xff]
          %v325 = vld [vmem:[%s243 + $0xe0] sm:$0xff]
          %v326 = vld [vmem:[%s243 + $0xe8] sm:$0xff]
          %v327 = vld [vmem:[%s243 + $0xf0] sm:$0xff]
          %v328 = vld [vmem:[%s243 + $0xf8] sm:$0xff]
          %v329 = vld [vmem:[%s243 + $0x100] sm:$0xff]
          %v330 = vld [vmem:[%s243 + $0x108] sm:$0xff]
          %v331 = vld [vmem:[%s243 + $0x110] sm:$0xff]
          %v332 = vld [vmem:[%s243 + $0x118] sm:$0xff]
          %v333 = vld [vmem:[%s243 + $0x120] sm:$0xff]
          %v334 = vld [vmem:[%s243 + $0x128] sm:$0xff]
          %v335 = vld [vmem:[%s243 + $0x130] sm:$0xff]
          %v336 = vld [vmem:[%s243 + $0x138] sm:$0xff]
          %v337 = vld [vmem:[%s243 + $0x140] sm:$0xff]
          %v338 = vld [vmem:[%s243 + $0x148] sm:$0xff]
          %v339 = vld [vmem:[%s243 + $0x150] sm:$0xff]
          %v340 = vld [vmem:[%s243 + $0x158] sm:$0xff]
          %v341 = vld [vmem:[%s243 + $0x160] sm:$0xff]
          %v342 = vld [vmem:[%s243 + $0x168] sm:$0xff]
          %v343 = vld [vmem:[%s243 + $0x170] sm:$0xff]
          %v344 = vld [vmem:[%s243 + $0x178] sm:$0xff]
          %v345 = vld [vmem:[%s243 + $0x180] sm:$0xff]
          %v346 = vld [vmem:[%s243 + $0x188] sm:$0xff]
          %v347 = vld [vmem:[%s243 + $0x190] sm:$0xff]
          %v348 = vld [vmem:[%s243 + $0x198] sm:$0xff]
          %v349 = vld [vmem:[%s243 + $0x1a0] sm:$0xff]
          %v350 = vld [vmem:[%s243 + $0x1a8] sm:$0xff]
          %v351 = vld [vmem:[%s243 + $0x1b0] sm:$0xff]
          %v352 = vld [vmem:[%s243 + $0x1b8] sm:$0xff]
          %v353 = vld [vmem:[%s243 + $0x1c0] sm:$0xff]
          %v354 = vld [vmem:[%s243 + $0x1c8] sm:$0xff]
          %v355 = vld [vmem:[%s243 + $0x1d0] sm:$0xff]
          %v356 = vld [vmem:[%s243 + $0x1d8] sm:$0xff]
          %v357 = vld [vmem:[%s243 + $0x1e0] sm:$0xff]
          %v358 = vld [vmem:[%s243 + $0x1e8] sm:$0xff]
          %v359 = vld [vmem:[%s243 + $0x1f0] sm:$0xff]
          %v360 = vld [vmem:[%s243 + $0x1f8] sm:$0xff]
          %v361 = vld [vmem:[%s243 + $0x200] sm:$0xff]
          %v362 = vld [vmem:[%s243 + $0x208] sm:$0xff]
          %v363 = vld [vmem:[%s243 + $0x210] sm:$0xff]
          %v364 = vld [vmem:[%s243 + $0x218] sm:$0xff]
          %v365 = vld [vmem:[%s243 + $0x220] sm:$0xff]
          %v366 = vld [vmem:[%s243 + $0x228] sm:$0xff]
          %v367 = vld [vmem:[%s243 + $0x230] sm:$0xff]
          %v368 = vld [vmem:[%s243 + $0x238] sm:$0xff]
          %v369 = vld [vmem:[%s243 + $0x240] sm:$0xff]
          %v370 = vld [vmem:[%s243 + $0x248] sm:$0xff]
          %v371 = vld [vmem:[%s243 + $0x250] sm:$0xff]
          %v372 = vld [vmem:[%s243 + $0x258] sm:$0xff]
          %v373 = vld [vmem:[%s243 + $0x260] sm:$0xff]
          %v374 = vld [vmem:[%s243 + $0x268] sm:$0xff]
          %v375 = vld [vmem:[%s243 + $0x270] sm:$0xff]
          %v376 = vld [vmem:[%s243 + $0x278] sm:$0xff]
          %v377 = vld [vmem:[%s243 + $0x280] sm:$0xff]
          %v378 = vld [vmem:[%s243 + $0x288] sm:$0xff]
          %v379 = vld [vmem:[%s243 + $0x290] sm:$0xff]
          %v380 = vld [vmem:[%s243 + $0x298] sm:$0xff]
          %v381 = vld [vmem:[%s243 + $0x2a0] sm:$0xff]
          %v382 = vld [vmem:[%s243 + $0x2a8] sm:$0xff]
          %v383 = vld [vmem:[%s243 + $0x2b0] sm:$0xff]
          %v384 = vld [vmem:[%s243 + $0x2b8] sm:$0xff]
          %v385 = vld [vmem:[%s243 + $0x2c0] sm:$0xff]
          %v386 = vld [vmem:[%s243 + $0x2c8] sm:$0xff]
          %v387 = vld [vmem:[%s243 + $0x2d0] sm:$0xff]
          %v388 = vld [vmem:[%s243 + $0x2d8] sm:$0xff]
          %v389 = vld [vmem:[%s243 + $0x2e0] sm:$0xff]
          %v390 = vld [vmem:[%s243 + $0x2e8] sm:$0xff]
          %v391 = vld [vmem:[%s243 + $0x2f0] sm:$0xff]
          %v392 = vld [vmem:[%s243 + $0x2f8] sm:$0xff]
          %v393 = vld [vmem:[%s243 + $0x300] sm:$0xff]
          %v394 = vld [vmem:[%s243 + $0x308] sm:$0xff]
          %v395 = vld [vmem:[%s243 + $0x310] sm:$0xff]
          %v396 = vld [vmem:[%s243 + $0x318] sm:$0xff]
          %v397 = vld [vmem:[%s243 + $0x320] sm:$0xff]
          %v398 = vld [vmem:[%s243 + $0x328] sm:$0xff]
          %v399 = vld [vmem:[%s243 + $0x330] sm:$0xff]
          %v400 = vld [vmem:[%s243 + $0x338] sm:$0xff]
          %v401 = vld [vmem:[%s243 + $0x340] sm:$0xff]
          %v402 = vld [vmem:[%s243 + $0x348] sm:$0xff]
          %v403 = vld [vmem:[%s243 + $0x350] sm:$0xff]
          %v404 = vld [vmem:[%s243 + $0x358] sm:$0xff]
          %v405 = vld [vmem:[%s243 + $0x360] sm:$0xff]
          %v406 = vld [vmem:[%s243 + $0x368] sm:$0xff]
          %v407 = vld [vmem:[%s243 + $0x370] sm:$0xff]
          %v408 = vld [vmem:[%s243 + $0x378] sm:$0xff]
          %v409 = vld [vmem:[%s243 + $0x380] sm:$0xff]
          %v410 = vld [vmem:[%s243 + $0x388] sm:$0xff]
          %v411 = vld [vmem:[%s243 + $0x390] sm:$0xff]
          %v412 = vld [vmem:[%s243 + $0x398] sm:$0xff]
          %v413 = vld [vmem:[%s243 + $0x3a0] sm:$0xff]
          %v414 = vld [vmem:[%s243 + $0x3a8] sm:$0xff]
          %v415 = vld [vmem:[%s243 + $0x3b0] sm:$0xff]
          %v416 = vld [vmem:[%s243 + $0x3b8] sm:$0xff]
          %v417 = vld [vmem:[%s243 + $0x3c0] sm:$0xff]
          %v418 = vld [vmem:[%s243 + $0x3c8] sm:$0xff]
          %v419 = vld [vmem:[%s243 + $0x3d0] sm:$0xff]
          %v420 = vld [vmem:[%s243 + $0x3d8] sm:$0xff]
          %v421 = vld [vmem:[%s243 + $0x3e0] sm:$0xff]
          %v422 = vld [vmem:[%s243 + $0x3e8] sm:$0xff]
          %v423 = vld [vmem:[%s243 + $0x3f0] sm:$0xff]
          %v424 = vld [vmem:[%s243 + $0x3f8] sm:$0xff]
          %v425 = vld [vmem:[#allocation2] sm:$0xff]
          %v426 = vld [vmem:[#allocation2 + $0x8] sm:$0xff]
          %v427 = vld [vmem:[#allocation2 + $0x10] sm:$0xff]
          %v428 = vld [vmem:[#allocation2 + $0x18] sm:$0xff]
          %v429 = vld [vmem:[#allocation2 + $0x20] sm:$0xff]
          %v430 = vld [vmem:[#allocation2 + $0x28] sm:$0xff]
          %v431 = vld [vmem:[#allocation2 + $0x30] sm:$0xff]
          %v432 = vld [vmem:[#allocation2 + $0x38] sm:$0xff]
          %v433 = vld [vmem:[#allocation2 + $0x40] sm:$0xff]
          %v434 = vld [vmem:[#allocation2 + $0x48] sm:$0xff]
          %v435 = vld [vmem:[#allocation2 + $0x50] sm:$0xff]
          %v436 = vld [vmem:[#allocation2 + $0x58] sm:$0xff]
          %v437 = vld [vmem:[#allocation2 + $0x60] sm:$0xff]
          %v438 = vld [vmem:[#allocation2 + $0x68] sm:$0xff]
          %v439 = vld [vmem:[#allocation2 + $0x70] sm:$0xff]
          %v440 = vld [vmem:[#allocation2 + $0x78] sm:$0xff]
          %v441 = vadd.f32 %v425, %v297
          %v442 = vadd.f32 %v426, %v305
          %v443 = vadd.f32 %v427, %v313
          %v444 = vadd.f32 %v428, %v321
          %v445 = vadd.f32 %v429, %v329
          %v446 = vadd.f32 %v430, %v337
          %v447 = vadd.f32 %v431, %v345
          %v448 = vadd.f32 %v432, %v353
          %v449 = vadd.f32 %v433, %v361
          %v450 = vadd.f32 %v434, %v369
          %v451 = vadd.f32 %v435, %v377
          %v452 = vadd.f32 %v436, %v385
          %v453 = vadd.f32 %v437, %v393
          %v454 = vadd.f32 %v438, %v401
          %v455 = vadd.f32 %v439, %v409
          %v456 = vadd.f32 %v440, %v417
          %v457 = vadd.f32 %v441, %v298
          %v458 = vadd.f32 %v442, %v306
          %v459 = vadd.f32 %v443, %v314
          %v460 = vadd.f32 %v444, %v322
          %v461 = vadd.f32 %v445, %v330
          %v462 = vadd.f32 %v446, %v338
          %v463 = vadd.f32 %v447, %v346
          %v464 = vadd.f32 %v448, %v354
          %v465 = vadd.f32 %v449, %v362
          %v466 = vadd.f32 %v450, %v370
          %v467 = vadd.f32 %v451, %v378
          %v468 = vadd.f32 %v452, %v386
          %v469 = vadd.f32 %v453, %v394
          %v470 = vadd.f32 %v454, %v402
          %v471 = vadd.f32 %v455, %v410
          %v472 = vadd.f32 %v456, %v418
          %v473 = vadd.f32 %v457, %v299
          %v474 = vadd.f32 %v458, %v307
          %v475 = vadd.f32 %v459, %v315
          %v476 = vadd.f32 %v460, %v323
          %v477 = vadd.f32 %v461, %v331
          %v478 = vadd.f32 %v462, %v339
          %v479 = vadd.f32 %v463, %v347
          %v480 = vadd.f32 %v464, %v355
          %v481 = vadd.f32 %v465, %v363
          %v482 = vadd.f32 %v466, %v371
          %v483 = vadd.f32 %v467, %v379
          %v484 = vadd.f32 %v468, %v387
          %v485 = vadd.f32 %v469, %v395
          %v486 = vadd.f32 %v470, %v403
          %v487 = vadd.f32 %v471, %v411
          %v488 = vadd.f32 %v472, %v419
          %v489 = vadd.f32 %v473, %v300
          %v490 = vadd.f32 %v474, %v308
          %v491 = vadd.f32 %v475, %v316
          %v492 = vadd.f32 %v476, %v324
          %v493 = vadd.f32 %v477, %v332
          %v494 = vadd.f32 %v478, %v340
          %v495 = vadd.f32 %v479, %v348
          %v496 = vadd.f32 %v480, %v356
          %v497 = vadd.f32 %v481, %v364
          %v498 = vadd.f32 %v482, %v372
          %v499 = vadd.f32 %v483, %v380
          %v500 = vadd.f32 %v484, %v388
          %v501 = vadd.f32 %v485, %v396
          %v502 = vadd.f32 %v486, %v404
          %v503 = vadd.f32 %v487, %v412
          %v504 = vadd.f32 %v488, %v420
          %v505 = vadd.f32 %v489, %v301
          %v506 = vadd.f32 %v490, %v309
          %v507 = vadd.f32 %v491, %v317
          %v508 = vadd.f32 %v492, %v325
          %v509 = vadd.f32 %v493, %v333
          %v510 = vadd.f32 %v494, %v341
          %v511 = vadd.f32 %v495, %v349
          %v512 = vadd.f32 %v496, %v357
          %v513 = vadd.f32 %v497, %v365
          %v514 = vadd.f32 %v498, %v373
          %v515 = vadd.f32 %v499, %v381
          %v516 = vadd.f32 %v500, %v389
          %v517 = vadd.f32 %v501, %v397
          %v518 = vadd.f32 %v502, %v405
          %v519 = vadd.f32 %v503, %v413
          %v520 = vadd.f32 %v504, %v421
          %v521 = vadd.f32 %v505, %v302
          %v522 = vadd.f32 %v506, %v310
          %v523 = vadd.f32 %v507, %v318
          %v524 = vadd.f32 %v508, %v326
          %v525 = vadd.f32 %v509, %v334
          %v526 = vadd.f32 %v510, %v342
          %v527 = vadd.f32 %v511, %v350
          %v528 = vadd.f32 %v512, %v358
          %v529 = vadd.f32 %v513, %v366
          %v530 = vadd.f32 %v514, %v374
          %v531 = vadd.f32 %v515, %v382
          %v532 = vadd.f32 %v516, %v390
          %v533 = vadd.f32 %v517, %v398
          %v534 = vadd.f32 %v518, %v406
          %v535 = vadd.f32 %v519, %v414
          %v536 = vadd.f32 %v520, %v422
          %v537 = vadd.f32 %v521, %v303
          %v538 = vadd.f32 %v522, %v311
          %v539 = vadd.f32 %v523, %v319
          %v540 = vadd.f32 %v524, %v327
          %v541 = vadd.f32 %v525, %v335
          %v542 = vadd.f32 %v526, %v343
          %v543 = vadd.f32 %v527, %v351
          %v544 = vadd.f32 %v528, %v359
          %v545 = vadd.f32 %v529, %v367
          %v546 = vadd.f32 %v530, %v375
          %v547 = vadd.f32 %v531, %v383
          %v548 = vadd.f32 %v532, %v391
          %v549 = vadd.f32 %v533, %v399
          %v550 = vadd.f32 %v534, %v407
          %v551 = vadd.f32 %v535, %v415
          %v552 = vadd.f32 %v536, %v423
          %v553 = vadd.f32 %v537, %v304
          %v554 = vadd.f32 %v538, %v312
          %v555 = vadd.f32 %v539, %v320
          %v556 = vadd.f32 %v540, %v328
          %v557 = vadd.f32 %v541, %v336
          %v558 = vadd.f32 %v542, %v344
          %v559 = vadd.f32 %v543, %v352
          %v560 = vadd.f32 %v544, %v360
          %v561 = vadd.f32 %v545, %v368
          %v562 = vadd.f32 %v546, %v376
          %v563 = vadd.f32 %v547, %v384
          %v564 = vadd.f32 %v548, %v392
          %v565 = vadd.f32 %v549, %v400
          %v566 = vadd.f32 %v550, %v408
          %v567 = vadd.f32 %v551, %v416
          %v568 = vadd.f32 %v552, %v424
          %569 = vst [vmem:[#allocation2] sm:$0xff] %v553
          %570 = vst [vmem:[#allocation2 + $0x8] sm:$0xff] %v554
          %571 = vst [vmem:[#allocation2 + $0x10] sm:$0xff] %v555
          %572 = vst [vmem:[#allocation2 + $0x18] sm:$0xff] %v556
          %573 = vst [vmem:[#allocation2 + $0x20] sm:$0xff] %v557
          %574 = vst [vmem:[#allocation2 + $0x28] sm:$0xff] %v558
          %575 = vst [vmem:[#allocation2 + $0x30] sm:$0xff] %v559
          %576 = vst [vmem:[#allocation2 + $0x38] sm:$0xff] %v560
          %577 = vst [vmem:[#allocation2 + $0x40] sm:$0xff] %v561
          %578 = vst [vmem:[#allocation2 + $0x48] sm:$0xff] %v562
          %579 = vst [vmem:[#allocation2 + $0x50] sm:$0xff] %v563
          %580 = vst [vmem:[#allocation2 + $0x58] sm:$0xff] %v564
          %581 = vst [vmem:[#allocation2 + $0x60] sm:$0xff] %v565
          %582 = vst [vmem:[#allocation2 + $0x68] sm:$0xff] %v566
          %583 = vst [vmem:[#allocation2 + $0x70] sm:$0xff] %v567
          %584 = vst [vmem:[#allocation2 + $0x78] sm:$0xff] %v568
          // Predicated region
          $region53: #{tpu_custom_call.1} parent=47 // pred_check
            %p585 = pneg %p277
          $region54: #{tpu_custom_call.1} parent=47 // pred_check_branch
            %587 = sbr.rel (%p585) target = $region56
          $region55: #{tpu_custom_call.1} parent=47 // pred_region
            %v588 = vld [vmem:[#allocation2] sm:$0xff]
            %v589 = vld [vmem:[#allocation2 + $0x8] sm:$0xff]
            %v590 = vld [vmem:[#allocation2 + $0x10] sm:$0xff]
            %v591 = vld [vmem:[#allocation2 + $0x18] sm:$0xff]
            %v592 = vld [vmem:[#allocation2 + $0x20] sm:$0xff]
            %v593 = vld [vmem:[#allocation2 + $0x28] sm:$0xff]
            %v594 = vld [vmem:[#allocation2 + $0x30] sm:$0xff]
            %v595 = vld [vmem:[#allocation2 + $0x38] sm:$0xff]
            %v596 = vld [vmem:[#allocation2 + $0x40] sm:$0xff]
            %v597 = vld [vmem:[#allocation2 + $0x48] sm:$0xff]
            %v598 = vld [vmem:[#allocation2 + $0x50] sm:$0xff]
            %v599 = vld [vmem:[#allocation2 + $0x58] sm:$0xff]
            %v600 = vld [vmem:[#allocation2 + $0x60] sm:$0xff]
            %v601 = vld [vmem:[#allocation2 + $0x68] sm:$0xff]
            %v602 = vld [vmem:[#allocation2 + $0x70] sm:$0xff]
            %v603 = vld [vmem:[#allocation2 + $0x78] sm:$0xff]
            %604 = vadd.xlane.f32.xlu0 %v588
            %v605 = vpop.xlane.xlu0 %604
            %606 = vadd.xlane.f32.xlu0 %v589
            %v607 = vpop.xlane.xlu0 %606
            %608 = vadd.xlane.f32.xlu0 %v590
            %v609 = vpop.xlane.xlu0 %608
            %610 = vadd.xlane.f32.xlu0 %v591
            %v611 = vpop.xlane.xlu0 %610
            %612 = vadd.xlane.f32.xlu0 %v592
            %v613 = vpop.xlane.xlu0 %612
            %614 = vadd.xlane.f32.xlu0 %v593
            %v615 = vpop.xlane.xlu0 %614
            %616 = vadd.xlane.f32.xlu0 %v594
            %v617 = vpop.xlane.xlu0 %616
            %618 = vadd.xlane.f32.xlu0 %v595
            %v619 = vpop.xlane.xlu0 %618
            %620 = vadd.xlane.f32.xlu0 %v596
            %v621 = vpop.xlane.xlu0 %620
            %622 = vadd.xlane.f32.xlu0 %v597
            %v623 = vpop.xlane.xlu0 %622
            %624 = vadd.xlane.f32.xlu0 %v598
            %v625 = vpop.xlane.xlu0 %624
            %626 = vadd.xlane.f32.xlu0 %v599
            %v627 = vpop.xlane.xlu0 %626
            %628 = vadd.xlane.f32.xlu0 %v600
            %v629 = vpop.xlane.xlu0 %628
            %630 = vadd.xlane.f32.xlu0 %v601
            %v631 = vpop.xlane.xlu0 %630
            %632 = vadd.xlane.f32.xlu0 %v602
            %v633 = vpop.xlane.xlu0 %632
            %634 = vadd.xlane.f32.xlu0 %v603
            %v635 = vpop.xlane.xlu0 %634
            %v636 = vmul.f32 %v605, 0.0009765625
            %v637 = vmul.f32 %v607, 0.0009765625
            %v638 = vmul.f32 %v609, 0.0009765625
            %v639 = vmul.f32 %v611, 0.0009765625
            %v640 = vmul.f32 %v613, 0.0009765625
            %v641 = vmul.f32 %v615, 0.0009765625
            %v642 = vmul.f32 %v617, 0.0009765625
            %v643 = vmul.f32 %v619, 0.0009765625
            %v644 = vmul.f32 %v621, 0.0009765625
            %v645 = vmul.f32 %v623, 0.0009765625
            %v646 = vmul.f32 %v625, 0.0009765625
            %v647 = vmul.f32 %v627, 0.0009765625
            %v648 = vmul.f32 %v629, 0.0009765625
            %v649 = vmul.f32 %v631, 0.0009765625
            %v650 = vmul.f32 %v633, 0.0009765625
            %v651 = vmul.f32 %v635, 0.0009765625
            %v652 = vld [vmem:[%s1] sm:$0xff]
            %v653 = vld [vmem:[%s1 + $0x8] sm:$0xff]
            %v654 = vld [vmem:[%s1 + $0x10] sm:$0xff]
            %v655 = vld [vmem:[%s1 + $0x18] sm:$0xff]
            %v656 = vld [vmem:[%s1 + $0x20] sm:$0xff]
            %v657 = vld [vmem:[%s1 + $0x28] sm:$0xff]
            %v658 = vld [vmem:[%s1 + $0x30] sm:$0xff]
            %v659 = vld [vmem:[%s1 + $0x38] sm:$0xff]
            %v660 = vld [vmem:[%s1 + $0x40] sm:$0xff]
            %v661 = vld [vmem:[%s1 + $0x48] sm:$0xff]
            %v662 = vld [vmem:[%s1 + $0x50] sm:$0xff]
            %v663 = vld [vmem:[%s1 + $0x58] sm:$0xff]
            %v664 = vld [vmem:[%s1 + $0x60] sm:$0xff]
            %v665 = vld [vmem:[%s1 + $0x68] sm:$0xff]
            %v666 = vld [vmem:[%s1 + $0x70] sm:$0xff]
            %v667 = vld [vmem:[%s1 + $0x78] sm:$0xff]
            %v668 = vld [vmem:[%s2] sm:$0x1]
            %v685 = vlaneseq
            %v686 = vand.u32 %v685, 127
            %v687 = vlaneseq
            %v688 = vshrl.u32 %v687, 7
            %v689 = vsub.s32 %v686, %v688
            %v690 = vrot.slane %v636, %v689
            %v691 = vadd.s32 %v686, 4294967288
            %v692 = vlaneseq
            %v693 = vshrl.u32 %v692, 7
            %v694 = vsub.s32 %v691, %v693
            %v695 = vrot.slane %v637, %v694
            %vm696 = vcmask 130112
            %v697 = vsel %vm696, %v695, %v690
            %v698 = vadd.s32 %v686, 4294967280
            %v699 = vlaneseq
            %v700 = vshrl.u32 %v699, 7
            %v701 = vsub.s32 %v698, %v700
            %v702 = vrot.slane %v638, %v701
            %vm703 = vcmask 195712
            %v704 = vsel %vm703, %v702, %v697
            %v705 = vadd.s32 %v686, 4294967272
            %v706 = vlaneseq
            %v707 = vshrl.u32 %v706, 7
            %v708 = vsub.s32 %v705, %v707
            %v709 = vrot.slane %v639, %v708
            %vm710 = vcmask 261312
            %v711 = vsel %vm710, %v709, %v704
            %v712 = vadd.s32 %v686, 4294967264
            %v713 = vlaneseq
            %v714 = vshrl.u32 %v713, 7
            %v715 = vsub.s32 %v712, %v714
            %v716 = vrot.slane %v640, %v715
            %vm717 = vcmask 326912
            %v718 = vsel %vm717, %v716, %v711
            %v719 = vadd.s32 %v686, 4294967256
            %v720 = vlaneseq
            %v721 = vshrl.u32 %v720, 7
            %v722 = vsub.s32 %v719, %v721
            %v723 = vrot.slane %v641, %v722
            %vm724 = vcmask 392512
            %v725 = vsel %vm724, %v723, %v718
            %v726 = vadd.s32 %v686, 4294967248
            %v727 = vlaneseq
            %v728 = vshrl.u32 %v727, 7
            %v729 = vsub.s32 %v726, %v728
            %v730 = vrot.slane %v642, %v729
            %vm731 = vcmask 458112
            %v732 = vsel %vm731, %v730, %v725
            %v733 = vadd.s32 %v686, 4294967240
            %v734 = vlaneseq
            %v735 = vshrl.u32 %v734, 7
            %v736 = vsub.s32 %v733, %v735
            %v737 = vrot.slane %v643, %v736
            %vm738 = vcmask 523712
            %v739 = vsel %vm738, %v737, %v732
            %v740 = vadd.s32 %v686, 4294967232
            %v741 = vlaneseq
            %v742 = vshrl.u32 %v741, 7
            %v743 = vsub.s32 %v740, %v742
            %v744 = vrot.slane %v644, %v743
            %vm745 = vcmask 589312
            %v746 = vsel %vm745, %v744, %v739
            %v747 = vadd.s32 %v686, 4294967224
            %v748 = vlaneseq
            %v749 = vshrl.u32 %v748, 7
            %v750 = vsub.s32 %v747, %v749
            %v751 = vrot.slane %v645, %v750
            %vm752 = vcmask 654912
            %v753 = vsel %vm752, %v751, %v746
            %v754 = vadd.s32 %v686, 4294967216
            %v755 = vlaneseq
            %v756 = vshrl.u32 %v755, 7
            %v757 = vsub.s32 %v754, %v756
            %v758 = vrot.slane %v646, %v757
            %vm759 = vcmask 720512
            %v760 = vsel %vm759, %v758, %v753
            %v761 = vadd.s32 %v686, 4294967208
            %v762 = vlaneseq
            %v763 = vshrl.u32 %v762, 7
            %v764 = vsub.s32 %v761, %v763
            %v765 = vrot.slane %v647, %v764
            %vm766 = vcmask 786112
            %v767 = vsel %vm766, %v765, %v760
            %v768 = vadd.s32 %v686, 4294967200
            %v769 = vlaneseq
            %v770 = vshrl.u32 %v769, 7
            %v771 = vsub.s32 %v768, %v770
            %v772 = vrot.slane %v648, %v771
            %vm773 = vcmask 851712
            %v774 = vsel %vm773, %v772, %v767
            %v775 = vadd.s32 %v686, 4294967192
            %v776 = vlaneseq
            %v777 = vshrl.u32 %v776, 7
            %v778 = vsub.s32 %v775, %v777
            %v779 = vrot.slane %v649, %v778
            %vm780 = vcmask 917312
            %v781 = vsel %vm780, %v779, %v774
            %v782 = vadd.s32 %v686, 4294967184
            %v783 = vlaneseq
            %v784 = vshrl.u32 %v783, 7
            %v785 = vsub.s32 %v782, %v784
            %v786 = vrot.slane %v650, %v785
            %vm787 = vcmask 982912
            %v788 = vsel %vm787, %v786, %v781
            %v789 = vadd.s32 %v686, 4294967176
            %v790 = vlaneseq
            %v791 = vshrl.u32 %v790, 7
            %v792 = vsub.s32 %v789, %v791
            %v793 = vrot.slane %v651, %v792
            %vm794 = vcmask 1048512
            %v795 = vsel %vm794, %v793, %v788
            %797 = vmatprep.subr.mxu0 0.0
            %798 = vmatpush1.msra.mxu0 %v652
            %799 = vmatprep.subr.mxu0 0.0
            %800 = vmatpush1.msra.mxu0 %v653
            %801 = vmatprep.subr.mxu0 0.0
            %802 = vmatpush1.msra.mxu0 %v654
            %803 = vmatprep.subr.mxu0 0.0
            %804 = vmatpush1.msra.mxu0 %v655
            %805 = vmatprep.subr.mxu0 0.0
            %806 = vmatpush1.msra.mxu0 %v656
            %807 = vmatprep.subr.mxu0 0.0
            %808 = vmatpush1.msra.mxu0 %v657
            %809 = vmatprep.subr.mxu0 0.0
            %810 = vmatpush1.msra.mxu0 %v658
            %811 = vmatprep.subr.mxu0 0.0
            %812 = vmatpush1.msra.mxu0 %v659
            %813 = vmatprep.subr.mxu0 0.0
            %814 = vmatpush1.msra.mxu0 %v660
            %815 = vmatprep.subr.mxu0 0.0
            %816 = vmatpush1.msra.mxu0 %v661
            %817 = vmatprep.subr.mxu0 0.0
            %818 = vmatpush1.msra.mxu0 %v662
            %819 = vmatprep.subr.mxu0 0.0
            %820 = vmatpush1.msra.mxu0 %v663
            %821 = vmatprep.subr.mxu0 0.0
            %822 = vmatpush1.msra.mxu0 %v664
            %823 = vmatprep.subr.mxu0 0.0
            %824 = vmatpush1.msra.mxu0 %v665
            %825 = vmatprep.subr.mxu0 0.0
            %826 = vmatpush1.msra.mxu0 %v666
            %827 = vmatprep.subr.mxu0 0.0
            %828 = vmatpush1.msra.mxu0 %v667
            %829 = vmatprep.subr.mxu0 0.0
            %830 = vmatpush1.msra.mxu0 0.0
            %831 = vmatprep.subr.mxu0 0.0
            %832 = vmatpush1.msra.mxu0 0.0
            %833 = vmatprep.subr.mxu0 0.0
            %834 = vmatpush1.msra.mxu0 0.0
            %835 = vmatprep.subr.mxu0 0.0
            %836 = vmatpush1.msra.mxu0 0.0
            %837 = vmatprep.subr.mxu0 0.0
            %838 = vmatpush1.msra.mxu0 0.0
            %839 = vmatprep.subr.mxu0 0.0
            %840 = vmatpush1.msra.mxu0 0.0
            %841 = vmatprep.subr.mxu0 0.0
            %842 = vmatpush1.msra.mxu0 0.0
            %843 = vmatprep.subr.mxu0 0.0
            %844 = vmatpush1.msra.mxu0 0.0
            %845 = vmatprep.subr.mxu0 0.0
            %846 = vmatpush1.msra.mxu0 0.0
            %847 = vmatprep.subr.mxu0 0.0
            %848 = vmatpush1.msra.mxu0 0.0
            %849 = vmatprep.subr.mxu0 0.0
            %850 = vmatpush1.msra.mxu0 0.0
            %851 = vmatprep.subr.mxu0 0.0
            %852 = vmatpush1.msra.mxu0 0.0
            %853 = vmatprep.subr.mxu0 0.0
            %854 = vmatpush1.msra.mxu0 0.0
            %855 = vmatprep.subr.mxu0 0.0
            %856 = vmatpush1.msra.mxu0 0.0
            %857 = vmatprep.subr.mxu0 0.0
            %858 = vmatpush1.msra.mxu0 0.0
            %859 = vmatprep.subr.mxu0 0.0
            %860 = vmatpush1.msra.mxu0 0.0
            %861 = vmatprep.mubr.f32.mxu0 0.0
            %862 = vmatmul.mubr.f32.gmra.mrb[0].mxu0 %v795
            %v863 = vpop.f32.mrb[0].mxu0
            %v864 = vadd.f32 %v668, %v863
            %v865 = vpop.f32.mrb[0].mxu0
            %866 = vdwg.mxu0
            %v867 = vmax.f32 %v864, 0.0
            %v868 = vld [vmem:[%s3] sm:$0xff]
            %v869 = vld [vmem:[%s3 + $0x8] sm:$0xff]
            %v870 = vld [vmem:[%s4] sm:$0x1]
            %vm871 = vcmask 130048
            %v873 = vsel %vm871, %v867, 0
            %875 = vmatprep.subr.mxu0 0.0
            %876 = vmatpush1.msra.mxu0 %v868
            %877 = vmatprep.subr.mxu0 0.0
            %878 = vmatpush1.msra.mxu0 %v869
            %879 = vmatprep.subr.mxu0 0.0
            %880 = vmatpush1.msra.mxu0 0.0
            %881 = vmatprep.subr.mxu0 0.0
            %882 = vmatpush1.msra.mxu0 0.0
            %883 = vmatprep.subr.mxu0 0.0
            %884 = vmatpush1.msra.mxu0 0.0
            %885 = vmatprep.subr.mxu0 0.0
            %886 = vmatpush1.msra.mxu0 0.0
            %887 = vmatprep.subr.mxu0 0.0
            %888 = vmatpush1.msra.mxu0 0.0
            %889 = vmatprep.subr.mxu0 0.0
            %890 = vmatpush1.msra.mxu0 0.0
            %891 = vmatprep.subr.mxu0 0.0
            %892 = vmatpush1.msra.mxu0 0.0
            %893 = vmatprep.subr.mxu0 0.0
            %894 = vmatpush1.msra.mxu0 0.0
            %895 = vmatprep.subr.mxu0 0.0
            %896 = vmatpush1.msra.mxu0 0.0
            %897 = vmatprep.subr.mxu0 0.0
            %898 = vmatpush1.msra.mxu0 0.0
            %899 = vmatprep.subr.mxu0 0.0
            %900 = vmatpush1.msra.mxu0 0.0
            %901 = vmatprep.subr.mxu0 0.0
            %902 = vmatpush1.msra.mxu0 0.0
            %903 = vmatprep.subr.mxu0 0.0
            %904 = vmatpush1.msra.mxu0 0.0
            %905 = vmatprep.subr.mxu0 0.0
            %906 = vmatpush1.msra.mxu0 0.0
            %907 = vmatprep.subr.mxu0 0.0
            %908 = vmatpush1.msra.mxu0 0.0
            %909 = vmatprep.subr.mxu0 0.0
            %910 = vmatpush1.msra.mxu0 0.0
            %911 = vmatprep.subr.mxu0 0.0
            %912 = vmatpush1.msra.mxu0 0.0
            %913 = vmatprep.subr.mxu0 0.0
            %914 = vmatpush1.msra.mxu0 0.0
            %915 = vmatprep.subr.mxu0 0.0
            %916 = vmatpush1.msra.mxu0 0.0
            %917 = vmatprep.subr.mxu0 0.0
            %918 = vmatpush1.msra.mxu0 0.0
            %919 = vmatprep.subr.mxu0 0.0
            %920 = vmatpush1.msra.mxu0 0.0
            %921 = vmatprep.subr.mxu0 0.0
            %922 = vmatpush1.msra.mxu0 0.0
            %923 = vmatprep.subr.mxu0 0.0
            %924 = vmatpush1.msra.mxu0 0.0
            %925 = vmatprep.subr.mxu0 0.0
            %926 = vmatpush1.msra.mxu0 0.0
            %927 = vmatprep.subr.mxu0 0.0
            %928 = vmatpush1.msra.mxu0 0.0
            %929 = vmatprep.subr.mxu0 0.0
            %930 = vmatpush1.msra.mxu0 0.0
            %931 = vmatprep.subr.mxu0 0.0
            %932 = vmatpush1.msra.mxu0 0.0
            %933 = vmatprep.subr.mxu0 0.0
            %934 = vmatpush1.msra.mxu0 0.0
            %935 = vmatprep.subr.mxu0 0.0
            %936 = vmatpush1.msra.mxu0 0.0
            %937 = vmatprep.subr.mxu0 0.0
            %938 = vmatpush1.msra.mxu0 0.0
            %939 = vmatprep.mubr.f32.mxu0 0.0
            %940 = vmatmul.mubr.f32.gmra.mrb[0].mxu0 %v873
            %v941 = vpop.f32.mrb[0].mxu0
            %v942 = vadd.f32 %v870, %v941
            %v943 = vpop.f32.mrb[0].mxu0
            %944 = vdwg.mxu0
            %v945 = vxor.u32 %v942, 2147483648
            %v946 = vmul.f32 %v945, 1.442695
            %v947 = vpow.pop %v946
            %v948 = vadd.f32 %v947, 1.0
            %v949 = vrcp.pop %v948
            %v950 = vmul.f32 1.0, %v949
            %v951 = vlaneseq
            %v952 = vshrl.u32 %v951, 7
            %v953 = vsub.s32 0, %v952
            %v954 = vrot.slane %v950, %v953
            %956 = vbcast.lane.b32.xlu0 %v954, 256
            %v957 = vpop.permute.xlu0 %956
            %s959 = sor.u32 256, 8
            %960 = vbcast.lane.b32.xlu0 %v954, %s959
            %v961 = vpop.permute.xlu0 %960
            %s963 = sor.u32 256, 16
            %964 = vbcast.lane.b32.xlu0 %v954, %s963
            %v965 = vpop.permute.xlu0 %964
            %s967 = sor.u32 256, 24
            %968 = vbcast.lane.b32.xlu0 %v954, %s967
            %v969 = vpop.permute.xlu0 %968
            %s971 = sor.u32 256, 32
            %972 = vbcast.lane.b32.xlu0 %v954, %s971
            %v973 = vpop.permute.xlu0 %972
            %s975 = sor.u32 256, 40
            %976 = vbcast.lane.b32.xlu0 %v954, %s975
            %v977 = vpop.permute.xlu0 %976
            %s979 = sor.u32 256, 48
            %980 = vbcast.lane.b32.xlu0 %v954, %s979
            %v981 = vpop.permute.xlu0 %980
            %s983 = sor.u32 256, 56
            %984 = vbcast.lane.b32.xlu0 %v954, %s983
            %v985 = vpop.permute.xlu0 %984
            %s987 = sor.u32 256, 64
            %988 = vbcast.lane.b32.xlu0 %v954, %s987
            %v989 = vpop.permute.xlu0 %988
            %s991 = sor.u32 256, 72
            %992 = vbcast.lane.b32.xlu0 %v954, %s991
            %v993 = vpop.permute.xlu0 %992
            %s995 = sor.u32 256, 80
            %996 = vbcast.lane.b32.xlu0 %v954, %s995
            %v997 = vpop.permute.xlu0 %996
            %s999 = sor.u32 256, 88
            %1000 = vbcast.lane.b32.xlu0 %v954, %s999
            %v1001 = vpop.permute.xlu0 %1000
            %s1003 = sor.u32 256, 96
            %1004 = vbcast.lane.b32.xlu0 %v954, %s1003
            %v1005 = vpop.permute.xlu0 %1004
            %s1007 = sor.u32 256, 104
            %1008 = vbcast.lane.b32.xlu0 %v954, %s1007
            %v1009 = vpop.permute.xlu0 %1008
            %s1011 = sor.u32 256, 112
            %1012 = vbcast.lane.b32.xlu0 %v954, %s1011
            %v1013 = vpop.permute.xlu0 %1012
            %s1015 = sor.u32 256, 120
            %1016 = vbcast.lane.b32.xlu0 %v954, %s1015
            %v1017 = vpop.permute.xlu0 %1016
            %1018 = vst [vmem:[#allocation3] sm:$0xff] %v957
            %1019 = vst [vmem:[#allocation3 + $0x8] sm:$0xff] %v961
            %1020 = vst [vmem:[#allocation3 + $0x10] sm:$0xff] %v965
            %1021 = vst [vmem:[#allocation3 + $0x18] sm:$0xff] %v969
            %1022 = vst [vmem:[#allocation3 + $0x20] sm:$0xff] %v973
            %1023 = vst [vmem:[#allocation3 + $0x28] sm:$0xff] %v977
            %1024 = vst [vmem:[#allocation3 + $0x30] sm:$0xff] %v981
            %1025 = vst [vmem:[#allocation3 + $0x38] sm:$0xff] %v985
            %1026 = vst [vmem:[#allocation3 + $0x40] sm:$0xff] %v989
            %1027 = vst [vmem:[#allocation3 + $0x48] sm:$0xff] %v993
            %1028 = vst [vmem:[#allocation3 + $0x50] sm:$0xff] %v997
            %1029 = vst [vmem:[#allocation3 + $0x58] sm:$0xff] %v1001
            %1030 = vst [vmem:[#allocation3 + $0x60] sm:$0xff] %v1005
            %1031 = vst [vmem:[#allocation3 + $0x68] sm:$0xff] %v1009
            %1032 = vst [vmem:[#allocation3 + $0x70] sm:$0xff] %v1013
            %1033 = vst [vmem:[#allocation3 + $0x78] sm:$0xff] %v1017
          $region56: #{tpu_custom_call.1} parent=47 // pred_fallthru
            _
        $region48: #{tpu_custom_call.1} parent=39 // pred_fallthru
          _
        %p1034 = scmp.eq.s32.totalorder %s28, 1
        // Predicated region
        $region57: #{tpu_custom_call.1} parent=39 // pred_check
          %p1035 = pneg %p1034
        $region58: #{tpu_custom_call.1} parent=39 // pred_check_branch
          %1037 = sbr.rel (%p1035) target = $region60
        $region59: #{tpu_custom_call.1} parent=39 // pred_region
          %v1038 = vld [vmem:[#allocation3] sm:$0xff]
          %v1039 = vld [vmem:[#allocation3 + $0x8] sm:$0xff]
          %v1040 = vld [vmem:[#allocation3 + $0x10] sm:$0xff]
          %v1041 = vld [vmem:[#allocation3 + $0x18] sm:$0xff]
          %v1042 = vld [vmem:[#allocation3 + $0x20] sm:$0xff]
          %v1043 = vld [vmem:[#allocation3 + $0x28] sm:$0xff]
          %v1044 = vld [vmem:[#allocation3 + $0x30] sm:$0xff]
          %v1045 = vld [vmem:[#allocation3 + $0x38] sm:$0xff]
          %v1046 = vld [vmem:[#allocation3 + $0x40] sm:$0xff]
          %v1047 = vld [vmem:[#allocation3 + $0x48] sm:$0xff]
          %v1048 = vld [vmem:[#allocation3 + $0x50] sm:$0xff]
          %v1049 = vld [vmem:[#allocation3 + $0x58] sm:$0xff]
          %v1050 = vld [vmem:[#allocation3 + $0x60] sm:$0xff]
          %v1051 = vld [vmem:[#allocation3 + $0x68] sm:$0xff]
          %v1052 = vld [vmem:[#allocation3 + $0x70] sm:$0xff]
          %v1053 = vld [vmem:[#allocation3 + $0x78] sm:$0xff]
          %v1054 = vld [vmem:[%s243] sm:$0xff]
          %v1055 = vld [vmem:[%s243 + $0x40] sm:$0xff]
          %v1056 = vld [vmem:[%s243 + $0x80] sm:$0xff]
          %v1057 = vld [vmem:[%s243 + $0xc0] sm:$0xff]
          %v1058 = vld [vmem:[%s243 + $0x100] sm:$0xff]
          %v1059 = vld [vmem:[%s243 + $0x140] sm:$0xff]
          %v1060 = vld [vmem:[%s243 + $0x180] sm:$0xff]
          %v1061 = vld [vmem:[%s243 + $0x1c0] sm:$0xff]
          %v1062 = vld [vmem:[%s243 + $0x200] sm:$0xff]
          %v1063 = vld [vmem:[%s243 + $0x240] sm:$0xff]
          %v1064 = vld [vmem:[%s243 + $0x280] sm:$0xff]
          %v1065 = vld [vmem:[%s243 + $0x2c0] sm:$0xff]
          %v1066 = vld [vmem:[%s243 + $0x300] sm:$0xff]
          %v1067 = vld [vmem:[%s243 + $0x340] sm:$0xff]
          %v1068 = vld [vmem:[%s243 + $0x380] sm:$0xff]
          %v1069 = vld [vmem:[%s243 + $0x3c0] sm:$0xff]
          %v1070 = vmul.f32 %v1054, %v1038
          %v1071 = vmul.f32 %v1055, %v1039
          %v1072 = vmul.f32 %v1056, %v1040
          %v1073 = vmul.f32 %v1057, %v1041
          %v1074 = vmul.f32 %v1058, %v1042
          %v1075 = vmul.f32 %v1059, %v1043
          %v1076 = vmul.f32 %v1060, %v1044
          %v1077 = vmul.f32 %v1061, %v1045
          %v1078 = vmul.f32 %v1062, %v1046
          %v1079 = vmul.f32 %v1063, %v1047
          %v1080 = vmul.f32 %v1064, %v1048
          %v1081 = vmul.f32 %v1065, %v1049
          %v1082 = vmul.f32 %v1066, %v1050
          %v1083 = vmul.f32 %v1067, %v1051
          %v1084 = vmul.f32 %v1068, %v1052
          %v1085 = vmul.f32 %v1069, %v1053
          %1086 = vst [vmem:[%s269] sm:$0xff] %v1070
          %1087 = vst [vmem:[%s269 + $0x40] sm:$0xff] %v1071
          %1088 = vst [vmem:[%s269 + $0x80] sm:$0xff] %v1072
          %1089 = vst [vmem:[%s269 + $0xc0] sm:$0xff] %v1073
          %1090 = vst [vmem:[%s269 + $0x100] sm:$0xff] %v1074
          %1091 = vst [vmem:[%s269 + $0x140] sm:$0xff] %v1075
          %1092 = vst [vmem:[%s269 + $0x180] sm:$0xff] %v1076
          %1093 = vst [vmem:[%s269 + $0x1c0] sm:$0xff] %v1077
          %1094 = vst [vmem:[%s269 + $0x200] sm:$0xff] %v1078
          %1095 = vst [vmem:[%s269 + $0x240] sm:$0xff] %v1079
          %1096 = vst [vmem:[%s269 + $0x280] sm:$0xff] %v1080
          %1097 = vst [vmem:[%s269 + $0x2c0] sm:$0xff] %v1081
          %1098 = vst [vmem:[%s269 + $0x300] sm:$0xff] %v1082
          %1099 = vst [vmem:[%s269 + $0x340] sm:$0xff] %v1083
          %1100 = vst [vmem:[%s269 + $0x380] sm:$0xff] %v1084
          %1101 = vst [vmem:[%s269 + $0x3c0] sm:$0xff] %v1085
          %v1102 = vld [vmem:[%s243 + $0x8] sm:$0xff]
          %v1103 = vld [vmem:[%s243 + $0x48] sm:$0xff]
          %v1104 = vld [vmem:[%s243 + $0x88] sm:$0xff]
          %v1105 = vld [vmem:[%s243 + $0xc8] sm:$0xff]
          %v1106 = vld [vmem:[%s243 + $0x108] sm:$0xff]
          %v1107 = vld [vmem:[%s243 + $0x148] sm:$0xff]
          %v1108 = vld [vmem:[%s243 + $0x188] sm:$0xff]
          %v1109 = vld [vmem:[%s243 + $0x1c8] sm:$0xff]
          %v1110 = vld [vmem:[%s243 + $0x208] sm:$0xff]
          %v1111 = vld [vmem:[%s243 + $0x248] sm:$0xff]
          %v1112 = vld [vmem:[%s243 + $0x288] sm:$0xff]
          %v1113 = vld [vmem:[%s243 + $0x2c8] sm:$0xff]
          %v1114 = vld [vmem:[%s243 + $0x308] sm:$0xff]
          %v1115 = vld [vmem:[%s243 + $0x348] sm:$0xff]
          %v1116 = vld [vmem:[%s243 + $0x388] sm:$0xff]
          %v1117 = vld [vmem:[%s243 + $0x3c8] sm:$0xff]
          %v1118 = vmul.f32 %v1102, %v1038
          %v1119 = vmul.f32 %v1103, %v1039
          %v1120 = vmul.f32 %v1104, %v1040
          %v1121 = vmul.f32 %v1105, %v1041
          %v1122 = vmul.f32 %v1106, %v1042
          %v1123 = vmul.f32 %v1107, %v1043
          %v1124 = vmul.f32 %v1108, %v1044
          %v1125 = vmul.f32 %v1109, %v1045
          %v1126 = vmul.f32 %v1110, %v1046
          %v1127 = vmul.f32 %v1111, %v1047
          %v1128 = vmul.f32 %v1112, %v1048
          %v1129 = vmul.f32 %v1113, %v1049
          %v1130 = vmul.f32 %v1114, %v1050
          %v1131 = vmul.f32 %v1115, %v1051
          %v1132 = vmul.f32 %v1116, %v1052
          %v1133 = vmul.f32 %v1117, %v1053
          %1134 = vst [vmem:[%s269 + $0x8] sm:$0xff] %v1118
          %1135 = vst [vmem:[%s269 + $0x48] sm:$0xff] %v1119
          %1136 = vst [vmem:[%s269 + $0x88] sm:$0xff] %v1120
          %1137 = vst [vmem:[%s269 + $0xc8] sm:$0xff] %v1121
          %1138 = vst [vmem:[%s269 + $0x108] sm:$0xff] %v1122
          %1139 = vst [vmem:[%s269 + $0x148] sm:$0xff] %v1123
          %1140 = vst [vmem:[%s269 + $0x188] sm:$0xff] %v1124
          %1141 = vst [vmem:[%s269 + $0x1c8] sm:$0xff] %v1125
          %1142 = vst [vmem:[%s269 + $0x208] sm:$0xff] %v1126
          %1143 = vst [vmem:[%s269 + $0x248] sm:$0xff] %v1127
          %1144 = vst [vmem:[%s269 + $0x288] sm:$0xff] %v1128
          %1145 = vst [vmem:[%s269 + $0x2c8] sm:$0xff] %v1129
          %1146 = vst [vmem:[%s269 + $0x308] sm:$0xff] %v1130
          %1147 = vst [vmem:[%s269 + $0x348] sm:$0xff] %v1131
          %1148 = vst [vmem:[%s269 + $0x388] sm:$0xff] %v1132
          %1149 = vst [vmem:[%s269 + $0x3c8] sm:$0xff] %v1133
          %v1150 = vld [vmem:[%s243 + $0x10] sm:$0xff]
          %v1151 = vld [vmem:[%s243 + $0x50] sm:$0xff]
          %v1152 = vld [vmem:[%s243 + $0x90] sm:$0xff]
          %v1153 = vld [vmem:[%s243 + $0xd0] sm:$0xff]
          %v1154 = vld [vmem:[%s243 + $0x110] sm:$0xff]
          %v1155 = vld [vmem:[%s243 + $0x150] sm:$0xff]
          %v1156 = vld [vmem:[%s243 + $0x190] sm:$0xff]
          %v1157 = vld [vmem:[%s243 + $0x1d0] sm:$0xff]
          %v1158 = vld [vmem:[%s243 + $0x210] sm:$0xff]
          %v1159 = vld [vmem:[%s243 + $0x250] sm:$0xff]
          %v1160 = vld [vmem:[%s243 + $0x290] sm:$0xff]
          %v1161 = vld [vmem:[%s243 + $0x2d0] sm:$0xff]
          %v1162 = vld [vmem:[%s243 + $0x310] sm:$0xff]
          %v1163 = vld [vmem:[%s243 + $0x350] sm:$0xff]
          %v1164 = vld [vmem:[%s243 + $0x390] sm:$0xff]
          %v1165 = vld [vmem:[%s243 + $0x3d0] sm:$0xff]
          %v1166 = vmul.f32 %v1150, %v1038
          %v1167 = vmul.f32 %v1151, %v1039
          %v1168 = vmul.f32 %v1152, %v1040
          %v1169 = vmul.f32 %v1153, %v1041
          %v1170 = vmul.f32 %v1154, %v1042
          %v1171 = vmul.f32 %v1155, %v1043
          %v1172 = vmul.f32 %v1156, %v1044
          %v1173 = vmul.f32 %v1157, %v1045
          %v1174 = vmul.f32 %v1158, %v1046
          %v1175 = vmul.f32 %v1159, %v1047
          %v1176 = vmul.f32 %v1160, %v1048
          %v1177 = vmul.f32 %v1161, %v1049
          %v1178 = vmul.f32 %v1162, %v1050
          %v1179 = vmul.f32 %v1163, %v1051
          %v1180 = vmul.f32 %v1164, %v1052
          %v1181 = vmul.f32 %v1165, %v1053
          %1182 = vst [vmem:[%s269 + $0x10] sm:$0xff] %v1166
          %1183 = vst [vmem:[%s269 + $0x50] sm:$0xff] %v1167
          %1184 = vst [vmem:[%s269 + $0x90] sm:$0xff] %v1168
          %1185 = vst [vmem:[%s269 + $0xd0] sm:$0xff] %v1169
          %1186 = vst [vmem:[%s269 + $0x110] sm:$0xff] %v1170
          %1187 = vst [vmem:[%s269 + $0x150] sm:$0xff] %v1171
          %1188 = vst [vmem:[%s269 + $0x190] sm:$0xff] %v1172
          %1189 = vst [vmem:[%s269 + $0x1d0] sm:$0xff] %v1173
          %1190 = vst [vmem:[%s269 + $0x210] sm:$0xff] %v1174
          %1191 = vst [vmem:[%s269 + $0x250] sm:$0xff] %v1175
          %1192 = vst [vmem:[%s269 + $0x290] sm:$0xff] %v1176
          %1193 = vst [vmem:[%s269 + $0x2d0] sm:$0xff] %v1177
          %1194 = vst [vmem:[%s269 + $0x310] sm:$0xff] %v1178
          %1195 = vst [vmem:[%s269 + $0x350] sm:$0xff] %v1179
          %1196 = vst [vmem:[%s269 + $0x390] sm:$0xff] %v1180
          %1197 = vst [vmem:[%s269 + $0x3d0] sm:$0xff] %v1181
          %v1198 = vld [vmem:[%s243 + $0x18] sm:$0xff]
          %v1199 = vld [vmem:[%s243 + $0x58] sm:$0xff]
          %v1200 = vld [vmem:[%s243 + $0x98] sm:$0xff]
          %v1201 = vld [vmem:[%s243 + $0xd8] sm:$0xff]
          %v1202 = vld [vmem:[%s243 + $0x118] sm:$0xff]
          %v1203 = vld [vmem:[%s243 + $0x158] sm:$0xff]
          %v1204 = vld [vmem:[%s243 + $0x198] sm:$0xff]
          %v1205 = vld [vmem:[%s243 + $0x1d8] sm:$0xff]
          %v1206 = vld [vmem:[%s243 + $0x218] sm:$0xff]
          %v1207 = vld [vmem:[%s243 + $0x258] sm:$0xff]
          %v1208 = vld [vmem:[%s243 + $0x298] sm:$0xff]
          %v1209 = vld [vmem:[%s243 + $0x2d8] sm:$0xff]
          %v1210 = vld [vmem:[%s243 + $0x318] sm:$0xff]
          %v1211 = vld [vmem:[%s243 + $0x358] sm:$0xff]
          %v1212 = vld [vmem:[%s243 + $0x398] sm:$0xff]
          %v1213 = vld [vmem:[%s243 + $0x3d8] sm:$0xff]
          %v1214 = vmul.f32 %v1198, %v1038
          %v1215 = vmul.f32 %v1199, %v1039
          %v1216 = vmul.f32 %v1200, %v1040
          %v1217 = vmul.f32 %v1201, %v1041
          %v1218 = vmul.f32 %v1202, %v1042
          %v1219 = vmul.f32 %v1203, %v1043
          %v1220 = vmul.f32 %v1204, %v1044
          %v1221 = vmul.f32 %v1205, %v1045
          %v1222 = vmul.f32 %v1206, %v1046
          %v1223 = vmul.f32 %v1207, %v1047
          %v1224 = vmul.f32 %v1208, %v1048
          %v1225 = vmul.f32 %v1209, %v1049
          %v1226 = vmul.f32 %v1210, %v1050
          %v1227 = vmul.f32 %v1211, %v1051
          %v1228 = vmul.f32 %v1212, %v1052
          %v1229 = vmul.f32 %v1213, %v1053
          %1230 = vst [vmem:[%s269 + $0x18] sm:$0xff] %v1214
          %1231 = vst [vmem:[%s269 + $0x58] sm:$0xff] %v1215
          %1232 = vst [vmem:[%s269 + $0x98] sm:$0xff] %v1216
          %1233 = vst [vmem:[%s269 + $0xd8] sm:$0xff] %v1217
          %1234 = vst [vmem:[%s269 + $0x118] sm:$0xff] %v1218
          %1235 = vst [vmem:[%s269 + $0x158] sm:$0xff] %v1219
          %1236 = vst [vmem:[%s269 + $0x198] sm:$0xff] %v1220
          %1237 = vst [vmem:[%s269 + $0x1d8] sm:$0xff] %v1221
          %1238 = vst [vmem:[%s269 + $0x218] sm:$0xff] %v1222
          %1239 = vst [vmem:[%s269 + $0x258] sm:$0xff] %v1223
          %1240 = vst [vmem:[%s269 + $0x298] sm:$0xff] %v1224
          %1241 = vst [vmem:[%s269 + $0x2d8] sm:$0xff] %v1225
          %1242 = vst [vmem:[%s269 + $0x318] sm:$0xff] %v1226
          %1243 = vst [vmem:[%s269 + $0x358] sm:$0xff] %v1227
          %1244 = vst [vmem:[%s269 + $0x398] sm:$0xff] %v1228
          %1245 = vst [vmem:[%s269 + $0x3d8] sm:$0xff] %v1229
          %v1246 = vld [vmem:[%s243 + $0x20] sm:$0xff]
          %v1247 = vld [vmem:[%s243 + $0x60] sm:$0xff]
          %v1248 = vld [vmem:[%s243 + $0xa0] sm:$0xff]
          %v1249 = vld [vmem:[%s243 + $0xe0] sm:$0xff]
          %v1250 = vld [vmem:[%s243 + $0x120] sm:$0xff]
          %v1251 = vld [vmem:[%s243 + $0x160] sm:$0xff]
          %v1252 = vld [vmem:[%s243 + $0x1a0] sm:$0xff]
          %v1253 = vld [vmem:[%s243 + $0x1e0] sm:$0xff]
          %v1254 = vld [vmem:[%s243 + $0x220] sm:$0xff]
          %v1255 = vld [vmem:[%s243 + $0x260] sm:$0xff]
          %v1256 = vld [vmem:[%s243 + $0x2a0] sm:$0xff]
          %v1257 = vld [vmem:[%s243 + $0x2e0] sm:$0xff]
          %v1258 = vld [vmem:[%s243 + $0x320] sm:$0xff]
          %v1259 = vld [vmem:[%s243 + $0x360] sm:$0xff]
          %v1260 = vld [vmem:[%s243 + $0x3a0] sm:$0xff]
          %v1261 = vld [vmem:[%s243 + $0x3e0] sm:$0xff]
          %v1262 = vmul.f32 %v1246, %v1038
          %v1263 = vmul.f32 %v1247, %v1039
          %v1264 = vmul.f32 %v1248, %v1040
          %v1265 = vmul.f32 %v1249, %v1041
          %v1266 = vmul.f32 %v1250, %v1042
          %v1267 = vmul.f32 %v1251, %v1043
          %v1268 = vmul.f32 %v1252, %v1044
          %v1269 = vmul.f32 %v1253, %v1045
          %v1270 = vmul.f32 %v1254, %v1046
          %v1271 = vmul.f32 %v1255, %v1047
          %v1272 = vmul.f32 %v1256, %v1048
          %v1273 = vmul.f32 %v1257, %v1049
          %v1274 = vmul.f32 %v1258, %v1050
          %v1275 = vmul.f32 %v1259, %v1051
          %v1276 = vmul.f32 %v1260, %v1052
          %v1277 = vmul.f32 %v1261, %v1053
          %1278 = vst [vmem:[%s269 + $0x20] sm:$0xff] %v1262
          %1279 = vst [vmem:[%s269 + $0x60] sm:$0xff] %v1263
          %1280 = vst [vmem:[%s269 + $0xa0] sm:$0xff] %v1264
          %1281 = vst [vmem:[%s269 + $0xe0] sm:$0xff] %v1265
          %1282 = vst [vmem:[%s269 + $0x120] sm:$0xff] %v1266
          %1283 = vst [vmem:[%s269 + $0x160] sm:$0xff] %v1267
          %1284 = vst [vmem:[%s269 + $0x1a0] sm:$0xff] %v1268
          %1285 = vst [vmem:[%s269 + $0x1e0] sm:$0xff] %v1269
          %1286 = vst [vmem:[%s269 + $0x220] sm:$0xff] %v1270
          %1287 = vst [vmem:[%s269 + $0x260] sm:$0xff] %v1271
          %1288 = vst [vmem:[%s269 + $0x2a0] sm:$0xff] %v1272
          %1289 = vst [vmem:[%s269 + $0x2e0] sm:$0xff] %v1273
          %1290 = vst [vmem:[%s269 + $0x320] sm:$0xff] %v1274
          %1291 = vst [vmem:[%s269 + $0x360] sm:$0xff] %v1275
          %1292 = vst [vmem:[%s269 + $0x3a0] sm:$0xff] %v1276
          %1293 = vst [vmem:[%s269 + $0x3e0] sm:$0xff] %v1277
          %v1294 = vld [vmem:[%s243 + $0x28] sm:$0xff]
          %v1295 = vld [vmem:[%s243 + $0x68] sm:$0xff]
          %v1296 = vld [vmem:[%s243 + $0xa8] sm:$0xff]
          %v1297 = vld [vmem:[%s243 + $0xe8] sm:$0xff]
          %v1298 = vld [vmem:[%s243 + $0x128] sm:$0xff]
          %v1299 = vld [vmem:[%s243 + $0x168] sm:$0xff]
          %v1300 = vld [vmem:[%s243 + $0x1a8] sm:$0xff]
          %v1301 = vld [vmem:[%s243 + $0x1e8] sm:$0xff]
          %v1302 = vld [vmem:[%s243 + $0x228] sm:$0xff]
          %v1303 = vld [vmem:[%s243 + $0x268] sm:$0xff]
          %v1304 = vld [vmem:[%s243 + $0x2a8] sm:$0xff]
          %v1305 = vld [vmem:[%s243 + $0x2e8] sm:$0xff]
          %v1306 = vld [vmem:[%s243 + $0x328] sm:$0xff]
          %v1307 = vld [vmem:[%s243 + $0x368] sm:$0xff]
          %v1308 = vld [vmem:[%s243 + $0x3a8] sm:$0xff]
          %v1309 = vld [vmem:[%s243 + $0x3e8] sm:$0xff]
          %v1310 = vmul.f32 %v1294, %v1038
          %v1311 = vmul.f32 %v1295, %v1039
          %v1312 = vmul.f32 %v1296, %v1040
          %v1313 = vmul.f32 %v1297, %v1041
          %v1314 = vmul.f32 %v1298, %v1042
          %v1315 = vmul.f32 %v1299, %v1043
          %v1316 = vmul.f32 %v1300, %v1044
          %v1317 = vmul.f32 %v1301, %v1045
          %v1318 = vmul.f32 %v1302, %v1046
          %v1319 = vmul.f32 %v1303, %v1047
          %v1320 = vmul.f32 %v1304, %v1048
          %v1321 = vmul.f32 %v1305, %v1049
          %v1322 = vmul.f32 %v1306, %v1050
          %v1323 = vmul.f32 %v1307, %v1051
          %v1324 = vmul.f32 %v1308, %v1052
          %v1325 = vmul.f32 %v1309, %v1053
          %1326 = vst [vmem:[%s269 + $0x28] sm:$0xff] %v1310
          %1327 = vst [vmem:[%s269 + $0x68] sm:$0xff] %v1311
          %1328 = vst [vmem:[%s269 + $0xa8] sm:$0xff] %v1312
          %1329 = vst [vmem:[%s269 + $0xe8] sm:$0xff] %v1313
          %1330 = vst [vmem:[%s269 + $0x128] sm:$0xff] %v1314
          %1331 = vst [vmem:[%s269 + $0x168] sm:$0xff] %v1315
          %1332 = vst [vmem:[%s269 + $0x1a8] sm:$0xff] %v1316
          %1333 = vst [vmem:[%s269 + $0x1e8] sm:$0xff] %v1317
          %1334 = vst [vmem:[%s269 + $0x228] sm:$0xff] %v1318
          %1335 = vst [vmem:[%s269 + $0x268] sm:$0xff] %v1319
          %1336 = vst [vmem:[%s269 + $0x2a8] sm:$0xff] %v1320
          %1337 = vst [vmem:[%s269 + $0x2e8] sm:$0xff] %v1321
          %1338 = vst [vmem:[%s269 + $0x328] sm:$0xff] %v1322
          %1339 = vst [vmem:[%s269 + $0x368] sm:$0xff] %v1323
          %1340 = vst [vmem:[%s269 + $0x3a8] sm:$0xff] %v1324
          %1341 = vst [vmem:[%s269 + $0x3e8] sm:$0xff] %v1325
          %v1342 = vld [vmem:[%s243 + $0x30] sm:$0xff]
          %v1343 = vld [vmem:[%s243 + $0x70] sm:$0xff]
          %v1344 = vld [vmem:[%s243 + $0xb0] sm:$0xff]
          %v1345 = vld [vmem:[%s243 + $0xf0] sm:$0xff]
          %v1346 = vld [vmem:[%s243 + $0x130] sm:$0xff]
          %v1347 = vld [vmem:[%s243 + $0x170] sm:$0xff]
          %v1348 = vld [vmem:[%s243 + $0x1b0] sm:$0xff]
          %v1349 = vld [vmem:[%s243 + $0x1f0] sm:$0xff]
          %v1350 = vld [vmem:[%s243 + $0x230] sm:$0xff]
          %v1351 = vld [vmem:[%s243 + $0x270] sm:$0xff]
          %v1352 = vld [vmem:[%s243 + $0x2b0] sm:$0xff]
          %v1353 = vld [vmem:[%s243 + $0x2f0] sm:$0xff]
          %v1354 = vld [vmem:[%s243 + $0x330] sm:$0xff]
          %v1355 = vld [vmem:[%s243 + $0x370] sm:$0xff]
          %v1356 = vld [vmem:[%s243 + $0x3b0] sm:$0xff]
          %v1357 = vld [vmem:[%s243 + $0x3f0] sm:$0xff]
          %v1358 = vmul.f32 %v1342, %v1038
          %v1359 = vmul.f32 %v1343, %v1039
          %v1360 = vmul.f32 %v1344, %v1040
          %v1361 = vmul.f32 %v1345, %v1041
          %v1362 = vmul.f32 %v1346, %v1042
          %v1363 = vmul.f32 %v1347, %v1043
          %v1364 = vmul.f32 %v1348, %v1044
          %v1365 = vmul.f32 %v1349, %v1045
          %v1366 = vmul.f32 %v1350, %v1046
          %v1367 = vmul.f32 %v1351, %v1047
          %v1368 = vmul.f32 %v1352, %v1048
          %v1369 = vmul.f32 %v1353, %v1049
          %v1370 = vmul.f32 %v1354, %v1050
          %v1371 = vmul.f32 %v1355, %v1051
          %v1372 = vmul.f32 %v1356, %v1052
          %v1373 = vmul.f32 %v1357, %v1053
          %1374 = vst [vmem:[%s269 + $0x30] sm:$0xff] %v1358
          %1375 = vst [vmem:[%s269 + $0x70] sm:$0xff] %v1359
          %1376 = vst [vmem:[%s269 + $0xb0] sm:$0xff] %v1360
          %1377 = vst [vmem:[%s269 + $0xf0] sm:$0xff] %v1361
          %1378 = vst [vmem:[%s269 + $0x130] sm:$0xff] %v1362
          %1379 = vst [vmem:[%s269 + $0x170] sm:$0xff] %v1363
          %1380 = vst [vmem:[%s269 + $0x1b0] sm:$0xff] %v1364
          %1381 = vst [vmem:[%s269 + $0x1f0] sm:$0xff] %v1365
          %1382 = vst [vmem:[%s269 + $0x230] sm:$0xff] %v1366
          %1383 = vst [vmem:[%s269 + $0x270] sm:$0xff] %v1367
          %1384 = vst [vmem:[%s269 + $0x2b0] sm:$0xff] %v1368
          %1385 = vst [vmem:[%s269 + $0x2f0] sm:$0xff] %v1369
          %1386 = vst [vmem:[%s269 + $0x330] sm:$0xff] %v1370
          %1387 = vst [vmem:[%s269 + $0x370] sm:$0xff] %v1371
          %1388 = vst [vmem:[%s269 + $0x3b0] sm:$0xff] %v1372
          %1389 = vst [vmem:[%s269 + $0x3f0] sm:$0xff] %v1373
          %v1390 = vld [vmem:[%s243 + $0x38] sm:$0xff]
          %v1391 = vld [vmem:[%s243 + $0x78] sm:$0xff]
          %v1392 = vld [vmem:[%s243 + $0xb8] sm:$0xff]
          %v1393 = vld [vmem:[%s243 + $0xf8] sm:$0xff]
          %v1394 = vld [vmem:[%s243 + $0x138] sm:$0xff]
          %v1395 = vld [vmem:[%s243 + $0x178] sm:$0xff]
          %v1396 = vld [vmem:[%s243 + $0x1b8] sm:$0xff]
          %v1397 = vld [vmem:[%s243 + $0x1f8] sm:$0xff]
          %v1398 = vld [vmem:[%s243 + $0x238] sm:$0xff]
          %v1399 = vld [vmem:[%s243 + $0x278] sm:$0xff]
          %v1400 = vld [vmem:[%s243 + $0x2b8] sm:$0xff]
          %v1401 = vld [vmem:[%s243 + $0x2f8] sm:$0xff]
          %v1402 = vld [vmem:[%s243 + $0x338] sm:$0xff]
          %v1403 = vld [vmem:[%s243 + $0x378] sm:$0xff]
          %v1404 = vld [vmem:[%s243 + $0x3b8] sm:$0xff]
          %v1405 = vld [vmem:[%s243 + $0x3f8] sm:$0xff]
          %v1406 = vmul.f32 %v1390, %v1038
          %v1407 = vmul.f32 %v1391, %v1039
          %v1408 = vmul.f32 %v1392, %v1040
          %v1409 = vmul.f32 %v1393, %v1041
          %v1410 = vmul.f32 %v1394, %v1042
          %v1411 = vmul.f32 %v1395, %v1043
          %v1412 = vmul.f32 %v1396, %v1044
          %v1413 = vmul.f32 %v1397, %v1045
          %v1414 = vmul.f32 %v1398, %v1046
          %v1415 = vmul.f32 %v1399, %v1047
          %v1416 = vmul.f32 %v1400, %v1048
          %v1417 = vmul.f32 %v1401, %v1049
          %v1418 = vmul.f32 %v1402, %v1050
          %v1419 = vmul.f32 %v1403, %v1051
          %v1420 = vmul.f32 %v1404, %v1052
          %v1421 = vmul.f32 %v1405, %v1053
          %1422 = vst [vmem:[%s269 + $0x38] sm:$0xff] %v1406
          %1423 = vst [vmem:[%s269 + $0x78] sm:$0xff] %v1407
          %1424 = vst [vmem:[%s269 + $0xb8] sm:$0xff] %v1408
          %1425 = vst [vmem:[%s269 + $0xf8] sm:$0xff] %v1409
          %1426 = vst [vmem:[%s269 + $0x138] sm:$0xff] %v1410
          %1427 = vst [vmem:[%s269 + $0x178] sm:$0xff] %v1411
          %1428 = vst [vmem:[%s269 + $0x1b8] sm:$0xff] %v1412
          %1429 = vst [vmem:[%s269 + $0x1f8] sm:$0xff] %v1413
          %1430 = vst [vmem:[%s269 + $0x238] sm:$0xff] %v1414
          %1431 = vst [vmem:[%s269 + $0x278] sm:$0xff] %v1415
          %1432 = vst [vmem:[%s269 + $0x2b8] sm:$0xff] %v1416
          %1433 = vst [vmem:[%s269 + $0x2f8] sm:$0xff] %v1417
          %1434 = vst [vmem:[%s269 + $0x338] sm:$0xff] %v1418
          %1435 = vst [vmem:[%s269 + $0x378] sm:$0xff] %v1419
          %1436 = vst [vmem:[%s269 + $0x3b8] sm:$0xff] %v1420
          %1437 = vst [vmem:[%s269 + $0x3f8] sm:$0xff] %v1421
        $region60: #{tpu_custom_call.1} parent=39 // pred_fallthru
          _
        %s1438 = sand.u32 %s165, 1
        %s1439 = scalar_lea.sflag [#allocation6], %s1438
        %s1440 = sand.u32 %s165, 1
        %s1441 = smul.addr %s1440, 1024
        %s1442 = scalar_lea.vmem [#allocation7], %s1441
        // Predicated region
        $region61: #{tpu_custom_call.1} parent=39 // pred_check
          %p1443 = pneg %p175
        $region62: #{tpu_custom_call.1} parent=39 // pred_check_branch
          %1445 = sbr.rel (%p1443) target = $region64
        $region63: #{tpu_custom_call.1} parent=39 // pred_region
          %s1446 = smul.u32 %s29, %s28
          %s1447 = smul.u32 8, %s1446
          %s1449 = ssub.s32 16384, 16384
          %1450 = vsyncadd %s1439, %s1449
          %s1451 = smul.addr %s27, 128
          %s1452 = sadd.s32 %s1447, %s1451
          %s1453 = smul.addr %s1452, 128
          %s1454 = scalar_lea.hbm %s5, %s1453
          %s1455 = sshll.u32 %s1442, 4
          %s1456 = int_to_ptr.vmem [resolvable:$true] %s1455
          %1461 = dma.vmem_to_hbm [thread:$0]  %s1456, 16384, %s1454, %s1439, 1024, 1024, 64
        $region64: #{tpu_custom_call.1} parent=39 // pred_fallthru
          _
      $region40: #{tpu_custom_call.1} parent=5 // pred_fallthru
        _
      %p1462 = scmp.le.s32.totalorder 2, %s17
      // Predicated region
      $region65: #{tpu_custom_call.1} parent=5 // pred_check
        %p1463 = pneg %p1462
      $region66: #{tpu_custom_call.1} parent=5 // pred_check_branch
        %1465 = sbr.rel (%p1463) target = $region68
      $region67: #{tpu_custom_call.1} parent=5 // pred_region
        %s1466 = ssub.s32 %s17, 2
        // Predicated region
        $region69: #{tpu_custom_call.1} parent=67 // pred_check
          %p1467 = pneg %p181
        $region70: #{tpu_custom_call.1} parent=67 // pred_check_branch
          %1469 = sbr.rel (%p1467) target = $region72
        $region71: #{tpu_custom_call.1} parent=67 // pred_region
          %s1470 = sand.u32 %s166, 1
          %s1471 = scalar_lea.sflag [#allocation6], %s1470
          %s1472 = sand.u32 %s166, 1
          %s1473 = smul.addr %s1472, 1024
          %s1474 = scalar_lea.vmem [#allocation7], %s1473
          %1475 = dma.done %s1471, 16384
        $region72: #{tpu_custom_call.1} parent=67 // pred_fallthru
          _
      $region68: #{tpu_custom_call.1} parent=5 // pred_fallthru
        _
    $region6: #{tpu_custom_call.1} parent=1 // loop_footer
      %s21 = sadd.s32 1, %s17
    $region7: #{tpu_custom_call.1} parent=1 // loop_footer_branch
      %16 = sbr.rel target = $region3
    $region8: #{tpu_custom_call.1} parent=1 // loop_exit
      _
    %1476 = vsyncpa [#allocation5], 1
    %s1477 = scalar_lea.sflag [#allocation5], 1
    %1478 = vsyncpa %s1477, 1
    %1479 = vsyncpa [#allocation6], 1
    %s1480 = scalar_lea.sflag [#allocation6], 1
    %1481 = vsyncpa %s1480, 1

</llo_original>
